<compile_context>
chip_gen: v7x
topology: tpu7x:2x2x1
jax: 0.10.0
libtpu: 0.0.40
codegen_flags: <defaults>
</compile_context>

<pallas_src>
import functools

import jax
import jax.numpy as jnp
import numpy as np
from jax.experimental import pallas as pl
from jax.experimental.pallas import tpu as pltpu


# ----------------------------- Pallas kernel -------------------------------

def fused_maskpro_conv_kernel(x_ref, w_ref, m_ref, b_ref, o_ref, *,
                              cin, kh, kw, wp, ho, wo):
    """One batch element of y = conv2d(x, weight*mask, bias), stride=1, "same".

    x_ref : (1, C, Hp*Wp)  bf16  zero-padded input image, spatial dims flattened
    w_ref : (O, K)         f32   weight; K axis ordered (kh, kw, C), C fastest
    m_ref : (O, K)         f32   binary N:M mask, same column order
    b_ref : (O, 1)         f32   bias
    o_ref : (1, O, Ho, Wo) f32   output in final NCHW layout

    The conv is evaluated over the padded pixel grid (flat index p = i*Wp + j),
    so every tap is a contiguous slice of the flat image; the Wp-Wo garbage
    columns per row are computed but never stored.
    """
    nq = (ho - 1) * wp + wo                       # flat positions needed
    nout = w_ref.shape[0]

    wm = w_ref[...] * m_ref[...]                  # (O, K) masked weight, f32 VPU op
    acc = jnp.zeros((nout, nq), jnp.float32)

    # Direct conv: K = kh*kw*C broadcasted multiply-adds on the VPU.
    # (MXU would be <7% filled at O=8 / C=4 and the kernel is HBM-bound anyway.)
    for t in range(kh * kw):                      # static -> fully unrolled
        di, dj = divmod(t, kw)
        off = di * wp + dj
        for c in range(cin):
            r = t * cin + c
            wcol = wm[:, r:r + 1]                                        # (O, 1)
            xrow = x_ref[0, c:c + 1, off:off + nq].astype(jnp.float32)   # (1, nq)
            acc = acc + wcol * xrow
    acc = acc + b_ref[...]                        # bias broadcast over lanes

    # Scatter the Wo valid columns of each padded row straight into NCHW layout.
    for i in range(ho):
        o_ref[0, :, i, :] = acc[:, i * wp:i * wp + wo]


# ----------------------------- JAX glue -------------------------------------

def deterministic_nm_mask(mask_logits, n, m):
    """torch: topk(logits, n, dim=1) -> scatter ones.  Returns (num_groups, m).

    NOTE: tie-breaking between exactly equal logits may differ from torch.topk.
    """
    del m  # group size is implicit in mask_logits.shape[1]
    num_groups = mask_logits.shape[0]
    _, top_idx = jax.lax.top_k(mask_logits, n)
    mask = jnp.zeros_like(mask_logits)
    mask = mask.at[jnp.arange(num_groups)[:, None], top_idx].set(1.0)
    return mask


def maskpro_conv2d_forward(x, weight, bias, mask_logits, n, m, stride=1, pad=1):
    """Forward of MaskProLayer wrapping a Conv2d, eval (deterministic mask) mode."""
    O, C, kh, kw = weight.shape
    K = C * kh * kw
    B, _, H, W = x.shape
    if stride != 1:
        # TODO(synk): general stride/dilation/groups (torch passes them through);
        # stride would make the taps strided lane slices (pl.ds with stride).
        raise NotImplementedError("fused kernel implements stride=1, dilation=1, groups=1")
    Hp, Wp = H + 2 * pad, W + 2 * pad
    Ho, Wo = Hp - kh + 1, Wp - kw + 1

    # N:M mask from learned logits (tiny; plain-JAX glue).  Grouping matches
    # torch: weight.view(O, C*kh*kw) chopped into contiguous groups of m.
    mask4 = deterministic_nm_mask(mask_logits, n, m).reshape(O, C, kh, kw)

    # Permute the K axis to (kh, kw, C) order (C fastest) so column t*C + c of
    # the flattened weight matches tap t / channel c inside the kernel.  The
    # same permutation is applied to the mask, so weight*mask is unchanged.
    w_flat = weight.transpose(0, 2, 3, 1).reshape(O, K).astype(jnp.float32)
    m_flat = mask4.transpose(0, 2, 3, 1).reshape(O, K).astype(jnp.float32)

    # bf16 the input BEFORE any layout work, pad once, flatten the padded grid.
    xflat = jnp.pad(x.astype(jnp.bfloat16),
                    ((0, 0), (0, 0), (pad, pad), (pad, pad))).reshape(B, C, Hp * Wp)

    kern = functools.partial(fused_maskpro_conv_kernel,
                             cin=C, kh=kh, kw=kw, wp=Wp, ho=Ho, wo=Wo)

    flops = 2 * B * O * K * Ho * Wo
    bytes_accessed = (xflat.size * 2 + w_flat.size * 4 + m_flat.size * 4
                      + O * 4 + B * O * Ho * Wo * 4)

    # TODO(synk): for large H*W, add an H-stripe grid axis with a haloed,
    # manually DMA'd input window (memory_space=pl.ANY + make_async_copy) so
    # the per-step VMEM working set stays bounded; at these shapes the whole
    # image (<3 KiB) is resident per step.
    out = pl.pallas_call(
        kern,
        out_shape=jax.ShapeDtypeStruct((B, O, Ho, Wo), jnp.float32),
        grid_spec=pltpu.PrefetchScalarGridSpec(
            num_scalar_prefetch=0,
            grid=(B,),                                                # one image / step
            in_specs=[
                pl.BlockSpec((1, C, Hp * Wp), lambda b: (b, 0, 0)),   # streamed x
                pl.BlockSpec((O, K), lambda b: (0, 0)),               # weight (resident)
                pl.BlockSpec((O, K), lambda b: (0, 0)),               # mask   (resident)
                pl.BlockSpec((O, 1), lambda b: (0, 0)),               # bias   (resident)
            ],
            out_specs=pl.BlockSpec((1, O, Ho, Wo), lambda b: (b, 0, 0, 0)),
        ),
        compiler_params=pltpu.CompilerParams(
            dimension_semantics=("parallel",),       # v7x: batch steps split over TCs
            vmem_limit_bytes=32 * 1024 * 1024),      # explicit budget, << v7x 64 MiB
        cost_estimate=pl.CostEstimate(
            flops=flops, transcendentals=0, bytes_accessed=bytes_accessed),
    )(xflat, w_flat, m_flat, bias.reshape(O, 1).astype(jnp.float32))

    return out


# ----------------------------- main ------------------------------------------

if __name__ == "__main__":
    # Conv2d(in_ch=4, out_ch=8, kernel=3, stride=1, padding=1), 2:4 sparsity
    B, C, H, W = 2, 4, 16, 16
    O, kh, kw = 8, 3, 3
    n_sp, m_sp = 2, 4
    logits_init_scale = 10.0

    K = C * kh * kw                        # reshaped_dim = 36
    num_groups = O * (K // m_sp)           # 72

    key = jax.random.PRNGKey(0)
    k_x, k_w, k_b, k_l = jax.random.split(key, 4)
    x = jax.random.normal(k_x, (B, C, H, W), dtype=jnp.float32)
    weight = jax.random.normal(k_w, (O, C, kh, kw), dtype=jnp.float32)
    bias = jax.random.normal(k_b, (O,), dtype=jnp.float32)
    mask_logits = jax.random.normal(k_l, (num_groups, m_sp), dtype=jnp.float32) * logits_init_scale

    # TODO(synk): Gumbel-softmax sampling (training=True), the REINFORCE
    # log_probs_cache and the current_mask buffer copy are training-time /
    # stateful side effects, not part of the eval forward implemented here.

    fwd = jax.jit(functools.partial(maskpro_conv2d_forward,
                                    n=n_sp, m=m_sp, stride=1, pad=1))
    out = jax.block_until_ready(fwd(x, weight, bias, mask_logits))

    # Reference: numpy sliding-window conv with the same masked weight and the
    # input rounded to bf16 (matching the kernel's bf16-in / f32-math numerics).
    mask4_ref = deterministic_nm_mask(mask_logits, n_sp, m_sp).reshape(O, C, kh, kw)
    w_masked = np.asarray(weight * mask4_ref).astype(np.float64)
    x_bf = np.asarray(x.astype(jnp.bfloat16).astype(jnp.float32)).astype(np.float64)
    xp = np.pad(x_bf, ((0, 0), (0, 0), (1, 1), (1, 1)))
    win = np.lib.stride_tricks.sliding_window_view(xp, (kh, kw), axis=(2, 3))  # (B,C,Ho,Wo,kh,kw)
    ref = np.einsum("bchwij,ocij->bohw", win, w_masked) \
        + np.asarray(bias).astype(np.float64).reshape(1, O, 1, 1)

    np.testing.assert_allclose(np.asarray(out), ref, rtol=1e-3, atol=1e-3)
    print("KERNEL_OK")
</pallas_src>

<mosaic_0001>
module attributes {stable_mosaic.version = 11 : i64} {
  func.func @fused_maskpro_conv_kernel(%arg0: i32, %arg1: memref<1x4x324xbf16, #tpu.memory_space<vmem>>, %arg2: memref<8x36xf32, #tpu.memory_space<vmem>>, %arg3: memref<8x36xf32, #tpu.memory_space<vmem>>, %arg4: memref<8x1xf32, #tpu.memory_space<vmem>>, %arg5: memref<1x8x16x16xf32, #tpu.memory_space<vmem>>) attributes {dimension_semantics = [#tpu.dimension_semantics<parallel>], iteration_bounds = array<i64: 2>, scalar_prefetch = 0 : i64, scratch_operands = 0 : i64, tpu.core_type = #tpu.core_type<tc>, window_params = [{transform_indices = @transform_0, window_bounds = array<i64: 1, 4, 324>}, {pipeline_mode = #tpu.pipeline_mode<synchronous>, transform_indices = @transform_1, window_bounds = array<i64: 8, 36>}, {pipeline_mode = #tpu.pipeline_mode<synchronous>, transform_indices = @transform_2, window_bounds = array<i64: 8, 36>}, {pipeline_mode = #tpu.pipeline_mode<synchronous>, transform_indices = @transform_3, window_bounds = array<i64: 8, 1>}, {transform_indices = @transform_4, window_bounds = array<i64: 1, 8, 16, 16>}]} {
    %c0 = arith.constant 0 : index
    %c0_0 = arith.constant 0 : index
    %0 = vector.load %arg2[%c0, %c0_0] : memref<8x36xf32, #tpu.memory_space<vmem>>, vector<8x36xf32>
    %c0_1 = arith.constant 0 : index
    %c0_2 = arith.constant 0 : index
    %1 = vector.load %arg3[%c0_1, %c0_2] : memref<8x36xf32, #tpu.memory_space<vmem>>, vector<8x36xf32>
    %2 = arith.mulf %0, %1 : vector<8x36xf32>
    %cst = arith.constant 0.000000e+00 : f32
    %3 = vector.broadcast %cst : f32 to vector<8x286xf32>
    %4 = vector.extract_strided_slice %2 {offsets = [0, 0], sizes = [8, 1], strides = [1, 1]} : vector<8x36xf32> to vector<8x1xf32>
    %c0_3 = arith.constant 0 : index
    %c0_4 = arith.constant 0 : index
    %c0_5 = arith.constant 0 : index
    %5 = vector.load %arg1[%c0_3, %c0_4, %c0_5] : memref<1x4x324xbf16, #tpu.memory_space<vmem>>, vector<1x1x286xbf16>
    %6 = vector.shape_cast %5 : vector<1x1x286xbf16> to vector<1x286xbf16>
    %7 = arith.extf %6 : vector<1x286xbf16> to vector<1x286xf32>
    %8 = vector.broadcast %4 : vector<8x1xf32> to vector<8x286xf32>
    %9 = vector.broadcast %7 : vector<1x286xf32> to vector<8x286xf32>
    %10 = arith.mulf %8, %9 : vector<8x286xf32>
    %11 = arith.addf %3, %10 : vector<8x286xf32>
    %12 = vector.extract_strided_slice %2 {offsets = [0, 1], sizes = [8, 1], strides = [1, 1]} : vector<8x36xf32> to vector<8x1xf32>
    %c0_6 = arith.constant 0 : index
    %c1 = arith.constant 1 : index
    %c0_7 = arith.constant 0 : index
    %13 = vector.load %arg1[%c0_6, %c1, %c0_7] : memref<1x4x324xbf16, #tpu.memory_space<vmem>>, vector<1x1x286xbf16>
    %14 = vector.shape_cast %13 : vector<1x1x286xbf16> to vector<1x286xbf16>
    %15 = arith.extf %14 : vector<1x286xbf16> to vector<1x286xf32>
    %16 = vector.broadcast %12 : vector<8x1xf32> to vector<8x286xf32>
    %17 = vector.broadcast %15 : vector<1x286xf32> to vector<8x286xf32>
    %18 = arith.mulf %16, %17 : vector<8x286xf32>
    %19 = arith.addf %11, %18 : vector<8x286xf32>
    %20 = vector.extract_strided_slice %2 {offsets = [0, 2], sizes = [8, 1], strides = [1, 1]} : vector<8x36xf32> to vector<8x1xf32>
    %c0_8 = arith.constant 0 : index
    %c2 = arith.constant 2 : index
    %c0_9 = arith.constant 0 : index
    %21 = vector.load %arg1[%c0_8, %c2, %c0_9] : memref<1x4x324xbf16, #tpu.memory_space<vmem>>, vector<1x1x286xbf16>
    %22 = vector.shape_cast %21 : vector<1x1x286xbf16> to vector<1x286xbf16>
    %23 = arith.extf %22 : vector<1x286xbf16> to vector<1x286xf32>
    %24 = vector.broadcast %20 : vector<8x1xf32> to vector<8x286xf32>
    %25 = vector.broadcast %23 : vector<1x286xf32> to vector<8x286xf32>
    %26 = arith.mulf %24, %25 : vector<8x286xf32>
    %27 = arith.addf %19, %26 : vector<8x286xf32>
    %28 = vector.extract_strided_slice %2 {offsets = [0, 3], sizes = [8, 1], strides = [1, 1]} : vector<8x36xf32> to vector<8x1xf32>
    %c0_10 = arith.constant 0 : index
    %c3 = arith.constant 3 : index
    %c0_11 = arith.constant 0 : index
    %29 = vector.load %arg1[%c0_10, %c3, %c0_11] : memref<1x4x324xbf16, #tpu.memory_space<vmem>>, vector<1x1x286xbf16>
    %30 = vector.shape_cast %29 : vector<1x1x286xbf16> to vector<1x286xbf16>
    %31 = arith.extf %30 : vector<1x286xbf16> to vector<1x286xf32>
    %32 = vector.broadcast %28 : vector<8x1xf32> to vector<8x286xf32>
    %33 = vector.broadcast %31 : vector<1x286xf32> to vector<8x286xf32>
    %34 = arith.mulf %32, %33 : vector<8x286xf32>
    %35 = arith.addf %27, %34 : vector<8x286xf32>
    %36 = vector.extract_strided_slice %2 {offsets = [0, 4], sizes = [8, 1], strides = [1, 1]} : vector<8x36xf32> to vector<8x1xf32>
    %c0_12 = arith.constant 0 : index
    %c0_13 = arith.constant 0 : index
    %c1_14 = arith.constant 1 : index
    %37 = vector.load %arg1[%c0_12, %c0_13, %c1_14] : memref<1x4x324xbf16, #tpu.memory_space<vmem>>, vector<1x1x286xbf16>
    %38 = vector.shape_cast %37 : vector<1x1x286xbf16> to vector<1x286xbf16>
    %39 = arith.extf %38 : vector<1x286xbf16> to vector<1x286xf32>
    %40 = vector.broadcast %36 : vector<8x1xf32> to vector<8x286xf32>
    %41 = vector.broadcast %39 : vector<1x286xf32> to vector<8x286xf32>
    %42 = arith.mulf %40, %41 : vector<8x286xf32>
    %43 = arith.addf %35, %42 : vector<8x286xf32>
    %44 = vector.extract_strided_slice %2 {offsets = [0, 5], sizes = [8, 1], strides = [1, 1]} : vector<8x36xf32> to vector<8x1xf32>
    %c0_15 = arith.constant 0 : index
    %c1_16 = arith.constant 1 : index
    %c1_17 = arith.constant 1 : index
    %45 = vector.load %arg1[%c0_15, %c1_16, %c1_17] : memref<1x4x324xbf16, #tpu.memory_space<vmem>>, vector<1x1x286xbf16>
    %46 = vector.shape_cast %45 : vector<1x1x286xbf16> to vector<1x286xbf16>
    %47 = arith.extf %46 : vector<1x286xbf16> to vector<1x286xf32>
    %48 = vector.broadcast %44 : vector<8x1xf32> to vector<8x286xf32>
    %49 = vector.broadcast %47 : vector<1x286xf32> to vector<8x286xf32>
    %50 = arith.mulf %48, %49 : vector<8x286xf32>
    %51 = arith.addf %43, %50 : vector<8x286xf32>
    %52 = vector.extract_strided_slice %2 {offsets = [0, 6], sizes = [8, 1], strides = [1, 1]} : vector<8x36xf32> to vector<8x1xf32>
    %c0_18 = arith.constant 0 : index
    %c2_19 = arith.constant 2 : index
    %c1_20 = arith.constant 1 : index
    %53 = vector.load %arg1[%c0_18, %c2_19, %c1_20] : memref<1x4x324xbf16, #tpu.memory_space<vmem>>, vector<1x1x286xbf16>
    %54 = vector.shape_cast %53 : vector<1x1x286xbf16> to vector<1x286xbf16>
    %55 = arith.extf %54 : vector<1x286xbf16> to vector<1x286xf32>
    %56 = vector.broadcast %52 : vector<8x1xf32> to vector<8x286xf32>
    %57 = vector.broadcast %55 : vector<1x286xf32> to vector<8x286xf32>
    %58 = arith.mulf %56, %57 : vector<8x286xf32>
    %59 = arith.addf %51, %58 : vector<8x286xf32>
    %60 = vector.extract_strided_slice %2 {offsets = [0, 7], sizes = [8, 1], strides = [1, 1]} : vector<8x36xf32> to vector<8x1xf32>
    %c0_21 = arith.constant 0 : index
    %c3_22 = arith.constant 3 : index
    %c1_23 = arith.constant 1 : index
    %61 = vector.load %arg1[%c0_21, %c3_22, %c1_23] : memref<1x4x324xbf16, #tpu.memory_space<vmem>>, vector<1x1x286xbf16>
    %62 = vector.shape_cast %61 : vector<1x1x286xbf16> to vector<1x286xbf16>
    %63 = arith.extf %62 : vector<1x286xbf16> to vector<1x286xf32>
    %64 = vector.broadcast %60 : vector<8x1xf32> to vector<8x286xf32>
    %65 = vector.broadcast %63 : vector<1x286xf32> to vector<8x286xf32>
    %66 = arith.mulf %64, %65 : vector<8x286xf32>
    %67 = arith.addf %59, %66 : vector<8x286xf32>
    %68 = vector.extract_strided_slice %2 {offsets = [0, 8], sizes = [8, 1], strides = [1, 1]} : vector<8x36xf32> to vector<8x1xf32>
    %c0_24 = arith.constant 0 : index
    %c0_25 = arith.constant 0 : index
    %c2_26 = arith.constant 2 : index
    %69 = vector.load %arg1[%c0_24, %c0_25, %c2_26] : memref<1x4x324xbf16, #tpu.memory_space<vmem>>, vector<1x1x286xbf16>
    %70 = vector.shape_cast %69 : vector<1x1x286xbf16> to vector<1x286xbf16>
    %71 = arith.extf %70 : vector<1x286xbf16> to vector<1x286xf32>
    %72 = vector.broadcast %68 : vector<8x1xf32> to vector<8x286xf32>
    %73 = vector.broadcast %71 : vector<1x286xf32> to vector<8x286xf32>
    %74 = arith.mulf %72, %73 : vector<8x286xf32>
    %75 = arith.addf %67, %74 : vector<8x286xf32>
    %76 = vector.extract_strided_slice %2 {offsets = [0, 9], sizes = [8, 1], strides = [1, 1]} : vector<8x36xf32> to vector<8x1xf32>
    %c0_27 = arith.constant 0 : index
    %c1_28 = arith.constant 1 : index
    %c2_29 = arith.constant 2 : index
    %77 = vector.load %arg1[%c0_27, %c1_28, %c2_29] : memref<1x4x324xbf16, #tpu.memory_space<vmem>>, vector<1x1x286xbf16>
    %78 = vector.shape_cast %77 : vector<1x1x286xbf16> to vector<1x286xbf16>
    %79 = arith.extf %78 : vector<1x286xbf16> to vector<1x286xf32>
    %80 = vector.broadcast %76 : vector<8x1xf32> to vector<8x286xf32>
    %81 = vector.broadcast %79 : vector<1x286xf32> to vector<8x286xf32>
    %82 = arith.mulf %80, %81 : vector<8x286xf32>
    %83 = arith.addf %75, %82 : vector<8x286xf32>
    %84 = vector.extract_strided_slice %2 {offsets = [0, 10], sizes = [8, 1], strides = [1, 1]} : vector<8x36xf32> to vector<8x1xf32>
    %c0_30 = arith.constant 0 : index
    %c2_31 = arith.constant 2 : index
    %c2_32 = arith.constant 2 : index
    %85 = vector.load %arg1[%c0_30, %c2_31, %c2_32] : memref<1x4x324xbf16, #tpu.memory_space<vmem>>, vector<1x1x286xbf16>
    %86 = vector.shape_cast %85 : vector<1x1x286xbf16> to vector<1x286xbf16>
    %87 = arith.extf %86 : vector<1x286xbf16> to vector<1x286xf32>
    %88 = vector.broadcast %84 : vector<8x1xf32> to vector<8x286xf32>
    %89 = vector.broadcast %87 : vector<1x286xf32> to vector<8x286xf32>
    %90 = arith.mulf %88, %89 : vector<8x286xf32>
    %91 = arith.addf %83, %90 : vector<8x286xf32>
    %92 = vector.extract_strided_slice %2 {offsets = [0, 11], sizes = [8, 1], strides = [1, 1]} : vector<8x36xf32> to vector<8x1xf32>
    %c0_33 = arith.constant 0 : index
    %c3_34 = arith.constant 3 : index
    %c2_35 = arith.constant 2 : index
    %93 = vector.load %arg1[%c0_33, %c3_34, %c2_35] : memref<1x4x324xbf16, #tpu.memory_space<vmem>>, vector<1x1x286xbf16>
    %94 = vector.shape_cast %93 : vector<1x1x286xbf16> to vector<1x286xbf16>
    %95 = arith.extf %94 : vector<1x286xbf16> to vector<1x286xf32>
    %96 = vector.broadcast %92 : vector<8x1xf32> to vector<8x286xf32>
    %97 = vector.broadcast %95 : vector<1x286xf32> to vector<8x286xf32>
    %98 = arith.mulf %96, %97 : vector<8x286xf32>
    %99 = arith.addf %91, %98 : vector<8x286xf32>
    %100 = vector.extract_strided_slice %2 {offsets = [0, 12], sizes = [8, 1], strides = [1, 1]} : vector<8x36xf32> to vector<8x1xf32>
    %c0_36 = arith.constant 0 : index
    %c0_37 = arith.constant 0 : index
    %c18 = arith.constant 18 : index
    %101 = vector.load %arg1[%c0_36, %c0_37, %c18] : memref<1x4x324xbf16, #tpu.memory_space<vmem>>, vector<1x1x286xbf16>
    %102 = vector.shape_cast %101 : vector<1x1x286xbf16> to vector<1x286xbf16>
    %103 = arith.extf %102 : vector<1x286xbf16> to vector<1x286xf32>
    %104 = vector.broadcast %100 : vector<8x1xf32> to vector<8x286xf32>
    %105 = vector.broadcast %103 : vector<1x286xf32> to vector<8x286xf32>
    %106 = arith.mulf %104, %105 : vector<8x286xf32>
    %107 = arith.addf %99, %106 : vector<8x286xf32>
    %108 = vector.extract_strided_slice %2 {offsets = [0, 13], sizes = [8, 1], strides = [1, 1]} : vector<8x36xf32> to vector<8x1xf32>
    %c0_38 = arith.constant 0 : index
    %c1_39 = arith.constant 1 : index
    %c18_40 = arith.constant 18 : index
    %109 = vector.load %arg1[%c0_38, %c1_39, %c18_40] : memref<1x4x324xbf16, #tpu.memory_space<vmem>>, vector<1x1x286xbf16>
    %110 = vector.shape_cast %109 : vector<1x1x286xbf16> to vector<1x286xbf16>
    %111 = arith.extf %110 : vector<1x286xbf16> to vector<1x286xf32>
    %112 = vector.broadcast %108 : vector<8x1xf32> to vector<8x286xf32>
    %113 = vector.broadcast %111 : vector<1x286xf32> to vector<8x286xf32>
    %114 = arith.mulf %112, %113 : vector<8x286xf32>
    %115 = arith.addf %107, %114 : vector<8x286xf32>
    %116 = vector.extract_strided_slice %2 {offsets = [0, 14], sizes = [8, 1], strides = [1, 1]} : vector<8x36xf32> to vector<8x1xf32>
    %c0_41 = arith.constant 0 : index
    %c2_42 = arith.constant 2 : index
    %c18_43 = arith.constant 18 : index
    %117 = vector.load %arg1[%c0_41, %c2_42, %c18_43] : memref<1x4x324xbf16, #tpu.memory_space<vmem>>, vector<1x1x286xbf16>
    %118 = vector.shape_cast %117 : vector<1x1x286xbf16> to vector<1x286xbf16>
    %119 = arith.extf %118 : vector<1x286xbf16> to vector<1x286xf32>
    %120 = vector.broadcast %116 : vector<8x1xf32> to vector<8x286xf32>
    %121 = vector.broadcast %119 : vector<1x286xf32> to vector<8x286xf32>
    %122 = arith.mulf %120, %121 : vector<8x286xf32>
    %123 = arith.addf %115, %122 : vector<8x286xf32>
    %124 = vector.extract_strided_slice %2 {offsets = [0, 15], sizes = [8, 1], strides = [1, 1]} : vector<8x36xf32> to vector<8x1xf32>
    %c0_44 = arith.constant 0 : index
    %c3_45 = arith.constant 3 : index
    %c18_46 = arith.constant 18 : index
    %125 = vector.load %arg1[%c0_44, %c3_45, %c18_46] : memref<1x4x324xbf16, #tpu.memory_space<vmem>>, vector<1x1x286xbf16>
    %126 = vector.shape_cast %125 : vector<1x1x286xbf16> to vector<1x286xbf16>
    %127 = arith.extf %126 : vector<1x286xbf16> to vector<1x286xf32>
    %128 = vector.broadcast %124 : vector<8x1xf32> to vector<8x286xf32>
    %129 = vector.broadcast %127 : vector<1x286xf32> to vector<8x286xf32>
    %130 = arith.mulf %128, %129 : vector<8x286xf32>
    %131 = arith.addf %123, %130 : vector<8x286xf32>
    %132 = vector.extract_strided_slice %2 {offsets = [0, 16], sizes = [8, 1], strides = [1, 1]} : vector<8x36xf32> to vector<8x1xf32>
    %c0_47 = arith.constant 0 : index
    %c0_48 = arith.constant 0 : index
    %c19 = arith.constant 19 : index
    %133 = vector.load %arg1[%c0_47, %c0_48, %c19] : memref<1x4x324xbf16, #tpu.memory_space<vmem>>, vector<1x1x286xbf16>
    %134 = vector.shape_cast %133 : vector<1x1x286xbf16> to vector<1x286xbf16>
    %135 = arith.extf %134 : vector<1x286xbf16> to vector<1x286xf32>
    %136 = vector.broadcast %132 : vector<8x1xf32> to vector<8x286xf32>
    %137 = vector.broadcast %135 : vector<1x286xf32> to vector<8x286xf32>
    %138 = arith.mulf %136, %137 : vector<8x286xf32>
    %139 = arith.addf %131, %138 : vector<8x286xf32>
    %140 = vector.extract_strided_slice %2 {offsets = [0, 17], sizes = [8, 1], strides = [1, 1]} : vector<8x36xf32> to vector<8x1xf32>
    %c0_49 = arith.constant 0 : index
    %c1_50 = arith.constant 1 : index
    %c19_51 = arith.constant 19 : index
    %141 = vector.load %arg1[%c0_49, %c1_50, %c19_51] : memref<1x4x324xbf16, #tpu.memory_space<vmem>>, vector<1x1x286xbf16>
    %142 = vector.shape_cast %141 : vector<1x1x286xbf16> to vector<1x286xbf16>
    %143 = arith.extf %142 : vector<1x286xbf16> to vector<1x286xf32>
    %144 = vector.broadcast %140 : vector<8x1xf32> to vector<8x286xf32>
    %145 = vector.broadcast %143 : vector<1x286xf32> to vector<8x286xf32>
    %146 = arith.mulf %144, %145 : vector<8x286xf32>
    %147 = arith.addf %139, %146 : vector<8x286xf32>
    %148 = vector.extract_strided_slice %2 {offsets = [0, 18], sizes = [8, 1], strides = [1, 1]} : vector<8x36xf32> to vector<8x1xf32>
    %c0_52 = arith.constant 0 : index
    %c2_53 = arith.constant 2 : index
    %c19_54 = arith.constant 19 : index
    %149 = vector.load %arg1[%c0_52, %c2_53, %c19_54] : memref<1x4x324xbf16, #tpu.memory_space<vmem>>, vector<1x1x286xbf16>
    %150 = vector.shape_cast %149 : vector<1x1x286xbf16> to vector<1x286xbf16>
    %151 = arith.extf %150 : vector<1x286xbf16> to vector<1x286xf32>
    %152 = vector.broadcast %148 : vector<8x1xf32> to vector<8x286xf32>
    %153 = vector.broadcast %151 : vector<1x286xf32> to vector<8x286xf32>
    %154 = arith.mulf %152, %153 : vector<8x286xf32>
    %155 = arith.addf %147, %154 : vector<8x286xf32>
    %156 = vector.extract_strided_slice %2 {offsets = [0, 19], sizes = [8, 1], strides = [1, 1]} : vector<8x36xf32> to vector<8x1xf32>
    %c0_55 = arith.constant 0 : index
    %c3_56 = arith.constant 3 : index
    %c19_57 = arith.constant 19 : index
    %157 = vector.load %arg1[%c0_55, %c3_56, %c19_57] : memref<1x4x324xbf16, #tpu.memory_space<vmem>>, vector<1x1x286xbf16>
    %158 = vector.shape_cast %157 : vector<1x1x286xbf16> to vector<1x286xbf16>
    %159 = arith.extf %158 : vector<1x286xbf16> to vector<1x286xf32>
    %160 = vector.broadcast %156 : vector<8x1xf32> to vector<8x286xf32>
    %161 = vector.broadcast %159 : vector<1x286xf32> to vector<8x286xf32>
    %162 = arith.mulf %160, %161 : vector<8x286xf32>
    %163 = arith.addf %155, %162 : vector<8x286xf32>
    %164 = vector.extract_strided_slice %2 {offsets = [0, 20], sizes = [8, 1], strides = [1, 1]} : vector<8x36xf32> to vector<8x1xf32>
    %c0_58 = arith.constant 0 : index
    %c0_59 = arith.constant 0 : index
    %c20 = arith.constant 20 : index
    %165 = vector.load %arg1[%c0_58, %c0_59, %c20] : memref<1x4x324xbf16, #tpu.memory_space<vmem>>, vector<1x1x286xbf16>
    %166 = vector.shape_cast %165 : vector<1x1x286xbf16> to vector<1x286xbf16>
    %167 = arith.extf %166 : vector<1x286xbf16> to vector<1x286xf32>
    %168 = vector.broadcast %164 : vector<8x1xf32> to vector<8x286xf32>
    %169 = vector.broadcast %167 : vector<1x286xf32> to vector<8x286xf32>
    %170 = arith.mulf %168, %169 : vector<8x286xf32>
    %171 = arith.addf %163, %170 : vector<8x286xf32>
    %172 = vector.extract_strided_slice %2 {offsets = [0, 21], sizes = [8, 1], strides = [1, 1]} : vector<8x36xf32> to vector<8x1xf32>
    %c0_60 = arith.constant 0 : index
    %c1_61 = arith.constant 1 : index
    %c20_62 = arith.constant 20 : index
    %173 = vector.load %arg1[%c0_60, %c1_61, %c20_62] : memref<1x4x324xbf16, #tpu.memory_space<vmem>>, vector<1x1x286xbf16>
    %174 = vector.shape_cast %173 : vector<1x1x286xbf16> to vector<1x286xbf16>
    %175 = arith.extf %174 : vector<1x286xbf16> to vector<1x286xf32>
    %176 = vector.broadcast %172 : vector<8x1xf32> to vector<8x286xf32>
    %177 = vector.broadcast %175 : vector<1x286xf32> to vector<8x286xf32>
    %178 = arith.mulf %176, %177 : vector<8x286xf32>
    %179 = arith.addf %171, %178 : vector<8x286xf32>
    %180 = vector.extract_strided_slice %2 {offsets = [0, 22], sizes = [8, 1], strides = [1, 1]} : vector<8x36xf32> to vector<8x1xf32>
    %c0_63 = arith.constant 0 : index
    %c2_64 = arith.constant 2 : index
    %c20_65 = arith.constant 20 : index
    %181 = vector.load %arg1[%c0_63, %c2_64, %c20_65] : memref<1x4x324xbf16, #tpu.memory_space<vmem>>, vector<1x1x286xbf16>
    %182 = vector.shape_cast %181 : vector<1x1x286xbf16> to vector<1x286xbf16>
    %183 = arith.extf %182 : vector<1x286xbf16> to vector<1x286xf32>
    %184 = vector.broadcast %180 : vector<8x1xf32> to vector<8x286xf32>
    %185 = vector.broadcast %183 : vector<1x286xf32> to vector<8x286xf32>
    %186 = arith.mulf %184, %185 : vector<8x286xf32>
    %187 = arith.addf %179, %186 : vector<8x286xf32>
    %188 = vector.extract_strided_slice %2 {offsets = [0, 23], sizes = [8, 1], strides = [1, 1]} : vector<8x36xf32> to vector<8x1xf32>
    %c0_66 = arith.constant 0 : index
    %c3_67 = arith.constant 3 : index
    %c20_68 = arith.constant 20 : index
    %189 = vector.load %arg1[%c0_66, %c3_67, %c20_68] : memref<1x4x324xbf16, #tpu.memory_space<vmem>>, vector<1x1x286xbf16>
    %190 = vector.shape_cast %189 : vector<1x1x286xbf16> to vector<1x286xbf16>
    %191 = arith.extf %190 : vector<1x286xbf16> to vector<1x286xf32>
    %192 = vector.broadcast %188 : vector<8x1xf32> to vector<8x286xf32>
    %193 = vector.broadcast %191 : vector<1x286xf32> to vector<8x286xf32>
    %194 = arith.mulf %192, %193 : vector<8x286xf32>
    %195 = arith.addf %187, %194 : vector<8x286xf32>
    %196 = vector.extract_strided_slice %2 {offsets = [0, 24], sizes = [8, 1], strides = [1, 1]} : vector<8x36xf32> to vector<8x1xf32>
    %c0_69 = arith.constant 0 : index
    %c0_70 = arith.constant 0 : index
    %c36 = arith.constant 36 : index
    %197 = vector.load %arg1[%c0_69, %c0_70, %c36] : memref<1x4x324xbf16, #tpu.memory_space<vmem>>, vector<1x1x286xbf16>
    %198 = vector.shape_cast %197 : vector<1x1x286xbf16> to vector<1x286xbf16>
    %199 = arith.extf %198 : vector<1x286xbf16> to vector<1x286xf32>
    %200 = vector.broadcast %196 : vector<8x1xf32> to vector<8x286xf32>
    %201 = vector.broadcast %199 : vector<1x286xf32> to vector<8x286xf32>
    %202 = arith.mulf %200, %201 : vector<8x286xf32>
    %203 = arith.addf %195, %202 : vector<8x286xf32>
    %204 = vector.extract_strided_slice %2 {offsets = [0, 25], sizes = [8, 1], strides = [1, 1]} : vector<8x36xf32> to vector<8x1xf32>
    %c0_71 = arith.constant 0 : index
    %c1_72 = arith.constant 1 : index
    %c36_73 = arith.constant 36 : index
    %205 = vector.load %arg1[%c0_71, %c1_72, %c36_73] : memref<1x4x324xbf16, #tpu.memory_space<vmem>>, vector<1x1x286xbf16>
    %206 = vector.shape_cast %205 : vector<1x1x286xbf16> to vector<1x286xbf16>
    %207 = arith.extf %206 : vector<1x286xbf16> to vector<1x286xf32>
    %208 = vector.broadcast %204 : vector<8x1xf32> to vector<8x286xf32>
    %209 = vector.broadcast %207 : vector<1x286xf32> to vector<8x286xf32>
    %210 = arith.mulf %208, %209 : vector<8x286xf32>
    %211 = arith.addf %203, %210 : vector<8x286xf32>
    %212 = vector.extract_strided_slice %2 {offsets = [0, 26], sizes = [8, 1], strides = [1, 1]} : vector<8x36xf32> to vector<8x1xf32>
    %c0_74 = arith.constant 0 : index
    %c2_75 = arith.constant 2 : index
    %c36_76 = arith.constant 36 : index
    %213 = vector.load %arg1[%c0_74, %c2_75, %c36_76] : memref<1x4x324xbf16, #tpu.memory_space<vmem>>, vector<1x1x286xbf16>
    %214 = vector.shape_cast %213 : vector<1x1x286xbf16> to vector<1x286xbf16>
    %215 = arith.extf %214 : vector<1x286xbf16> to vector<1x286xf32>
    %216 = vector.broadcast %212 : vector<8x1xf32> to vector<8x286xf32>
    %217 = vector.broadcast %215 : vector<1x286xf32> to vector<8x286xf32>
    %218 = arith.mulf %216, %217 : vector<8x286xf32>
    %219 = arith.addf %211, %218 : vector<8x286xf32>
    %220 = vector.extract_strided_slice %2 {offsets = [0, 27], sizes = [8, 1], strides = [1, 1]} : vector<8x36xf32> to vector<8x1xf32>
    %c0_77 = arith.constant 0 : index
    %c3_78 = arith.constant 3 : index
    %c36_79 = arith.constant 36 : index
    %221 = vector.load %arg1[%c0_77, %c3_78, %c36_79] : memref<1x4x324xbf16, #tpu.memory_space<vmem>>, vector<1x1x286xbf16>
    %222 = vector.shape_cast %221 : vector<1x1x286xbf16> to vector<1x286xbf16>
    %223 = arith.extf %222 : vector<1x286xbf16> to vector<1x286xf32>
    %224 = vector.broadcast %220 : vector<8x1xf32> to vector<8x286xf32>
    %225 = vector.broadcast %223 : vector<1x286xf32> to vector<8x286xf32>
    %226 = arith.mulf %224, %225 : vector<8x286xf32>
    %227 = arith.addf %219, %226 : vector<8x286xf32>
    %228 = vector.extract_strided_slice %2 {offsets = [0, 28], sizes = [8, 1], strides = [1, 1]} : vector<8x36xf32> to vector<8x1xf32>
    %c0_80 = arith.constant 0 : index
    %c0_81 = arith.constant 0 : index
    %c37 = arith.constant 37 : index
    %229 = vector.load %arg1[%c0_80, %c0_81, %c37] : memref<1x4x324xbf16, #tpu.memory_space<vmem>>, vector<1x1x286xbf16>
    %230 = vector.shape_cast %229 : vector<1x1x286xbf16> to vector<1x286xbf16>
    %231 = arith.extf %230 : vector<1x286xbf16> to vector<1x286xf32>
    %232 = vector.broadcast %228 : vector<8x1xf32> to vector<8x286xf32>
    %233 = vector.broadcast %231 : vector<1x286xf32> to vector<8x286xf32>
    %234 = arith.mulf %232, %233 : vector<8x286xf32>
    %235 = arith.addf %227, %234 : vector<8x286xf32>
    %236 = vector.extract_strided_slice %2 {offsets = [0, 29], sizes = [8, 1], strides = [1, 1]} : vector<8x36xf32> to vector<8x1xf32>
    %c0_82 = arith.constant 0 : index
    %c1_83 = arith.constant 1 : index
    %c37_84 = arith.constant 37 : index
    %237 = vector.load %arg1[%c0_82, %c1_83, %c37_84] : memref<1x4x324xbf16, #tpu.memory_space<vmem>>, vector<1x1x286xbf16>
    %238 = vector.shape_cast %237 : vector<1x1x286xbf16> to vector<1x286xbf16>
    %239 = arith.extf %238 : vector<1x286xbf16> to vector<1x286xf32>
    %240 = vector.broadcast %236 : vector<8x1xf32> to vector<8x286xf32>
    %241 = vector.broadcast %239 : vector<1x286xf32> to vector<8x286xf32>
    %242 = arith.mulf %240, %241 : vector<8x286xf32>
    %243 = arith.addf %235, %242 : vector<8x286xf32>
    %244 = vector.extract_strided_slice %2 {offsets = [0, 30], sizes = [8, 1], strides = [1, 1]} : vector<8x36xf32> to vector<8x1xf32>
    %c0_85 = arith.constant 0 : index
    %c2_86 = arith.constant 2 : index
    %c37_87 = arith.constant 37 : index
    %245 = vector.load %arg1[%c0_85, %c2_86, %c37_87] : memref<1x4x324xbf16, #tpu.memory_space<vmem>>, vector<1x1x286xbf16>
    %246 = vector.shape_cast %245 : vector<1x1x286xbf16> to vector<1x286xbf16>
    %247 = arith.extf %246 : vector<1x286xbf16> to vector<1x286xf32>
    %248 = vector.broadcast %244 : vector<8x1xf32> to vector<8x286xf32>
    %249 = vector.broadcast %247 : vector<1x286xf32> to vector<8x286xf32>
    %250 = arith.mulf %248, %249 : vector<8x286xf32>
    %251 = arith.addf %243, %250 : vector<8x286xf32>
    %252 = vector.extract_strided_slice %2 {offsets = [0, 31], sizes = [8, 1], strides = [1, 1]} : vector<8x36xf32> to vector<8x1xf32>
    %c0_88 = arith.constant 0 : index
    %c3_89 = arith.constant 3 : index
    %c37_90 = arith.constant 37 : index
    %253 = vector.load %arg1[%c0_88, %c3_89, %c37_90] : memref<1x4x324xbf16, #tpu.memory_space<vmem>>, vector<1x1x286xbf16>
    %254 = vector.shape_cast %253 : vector<1x1x286xbf16> to vector<1x286xbf16>
    %255 = arith.extf %254 : vector<1x286xbf16> to vector<1x286xf32>
    %256 = vector.broadcast %252 : vector<8x1xf32> to vector<8x286xf32>
    %257 = vector.broadcast %255 : vector<1x286xf32> to vector<8x286xf32>
    %258 = arith.mulf %256, %257 : vector<8x286xf32>
    %259 = arith.addf %251, %258 : vector<8x286xf32>
    %260 = vector.extract_strided_slice %2 {offsets = [0, 32], sizes = [8, 1], strides = [1, 1]} : vector<8x36xf32> to vector<8x1xf32>
    %c0_91 = arith.constant 0 : index
    %c0_92 = arith.constant 0 : index
    %c38 = arith.constant 38 : index
    %261 = vector.load %arg1[%c0_91, %c0_92, %c38] : memref<1x4x324xbf16, #tpu.memory_space<vmem>>, vector<1x1x286xbf16>
    %262 = vector.shape_cast %261 : vector<1x1x286xbf16> to vector<1x286xbf16>
    %263 = arith.extf %262 : vector<1x286xbf16> to vector<1x286xf32>
    %264 = vector.broadcast %260 : vector<8x1xf32> to vector<8x286xf32>
    %265 = vector.broadcast %263 : vector<1x286xf32> to vector<8x286xf32>
    %266 = arith.mulf %264, %265 : vector<8x286xf32>
    %267 = arith.addf %259, %266 : vector<8x286xf32>
    %268 = vector.extract_strided_slice %2 {offsets = [0, 33], sizes = [8, 1], strides = [1, 1]} : vector<8x36xf32> to vector<8x1xf32>
    %c0_93 = arith.constant 0 : index
    %c1_94 = arith.constant 1 : index
    %c38_95 = arith.constant 38 : index
    %269 = vector.load %arg1[%c0_93, %c1_94, %c38_95] : memref<1x4x324xbf16, #tpu.memory_space<vmem>>, vector<1x1x286xbf16>
    %270 = vector.shape_cast %269 : vector<1x1x286xbf16> to vector<1x286xbf16>
    %271 = arith.extf %270 : vector<1x286xbf16> to vector<1x286xf32>
    %272 = vector.broadcast %268 : vector<8x1xf32> to vector<8x286xf32>
    %273 = vector.broadcast %271 : vector<1x286xf32> to vector<8x286xf32>
    %274 = arith.mulf %272, %273 : vector<8x286xf32>
    %275 = arith.addf %267, %274 : vector<8x286xf32>
    %276 = vector.extract_strided_slice %2 {offsets = [0, 34], sizes = [8, 1], strides = [1, 1]} : vector<8x36xf32> to vector<8x1xf32>
    %c0_96 = arith.constant 0 : index
    %c2_97 = arith.constant 2 : index
    %c38_98 = arith.constant 38 : index
    %277 = vector.load %arg1[%c0_96, %c2_97, %c38_98] : memref<1x4x324xbf16, #tpu.memory_space<vmem>>, vector<1x1x286xbf16>
    %278 = vector.shape_cast %277 : vector<1x1x286xbf16> to vector<1x286xbf16>
    %279 = arith.extf %278 : vector<1x286xbf16> to vector<1x286xf32>
    %280 = vector.broadcast %276 : vector<8x1xf32> to vector<8x286xf32>
    %281 = vector.broadcast %279 : vector<1x286xf32> to vector<8x286xf32>
    %282 = arith.mulf %280, %281 : vector<8x286xf32>
    %283 = arith.addf %275, %282 : vector<8x286xf32>
    %284 = vector.extract_strided_slice %2 {offsets = [0, 35], sizes = [8, 1], strides = [1, 1]} : vector<8x36xf32> to vector<8x1xf32>
    %c0_99 = arith.constant 0 : index
    %c3_100 = arith.constant 3 : index
    %c38_101 = arith.constant 38 : index
    %285 = vector.load %arg1[%c0_99, %c3_100, %c38_101] : memref<1x4x324xbf16, #tpu.memory_space<vmem>>, vector<1x1x286xbf16>
    %286 = vector.shape_cast %285 : vector<1x1x286xbf16> to vector<1x286xbf16>
    %287 = arith.extf %286 : vector<1x286xbf16> to vector<1x286xf32>
    %288 = vector.broadcast %284 : vector<8x1xf32> to vector<8x286xf32>
    %289 = vector.broadcast %287 : vector<1x286xf32> to vector<8x286xf32>
    %290 = arith.mulf %288, %289 : vector<8x286xf32>
    %291 = arith.addf %283, %290 : vector<8x286xf32>
    %c0_102 = arith.constant 0 : index
    %c0_103 = arith.constant 0 : index
    %292 = vector.load %arg4[%c0_102, %c0_103] : memref<8x1xf32, #tpu.memory_space<vmem>>, vector<8x1xf32>
    %293 = vector.broadcast %292 : vector<8x1xf32> to vector<8x286xf32>
    %294 = arith.addf %291, %293 : vector<8x286xf32>
    %295 = vector.extract_strided_slice %294 {offsets = [0, 0], sizes = [8, 16], strides = [1, 1]} : vector<8x286xf32> to vector<8x16xf32>
    %c0_104 = arith.constant 0 : index
    %c0_105 = arith.constant 0 : index
    %c0_106 = arith.constant 0 : index
    %c0_107 = arith.constant 0 : index
    %296 = vector.load %arg5[%c0_104, %c0_105, %c0_106, %c0_107] : memref<1x8x16x16xf32, #tpu.memory_space<vmem>>, vector<1x8x1x16xf32>
    %297 = vector.shape_cast %296 : vector<1x8x1x16xf32> to vector<8x16xf32>
    %298 = vector.shape_cast %295 : vector<8x16xf32> to vector<1x8x1x16xf32>
    tpu.vector_store %arg5[%c0_104, %c0_105, %c0_106, %c0_107], %298 {strides = array<i32>} : memref<1x8x16x16xf32, #tpu.memory_space<vmem>>, vector<1x8x1x16xf32>,
    %299 = vector.extract_strided_slice %294 {offsets = [0, 18], sizes = [8, 16], strides = [1, 1]} : vector<8x286xf32> to vector<8x16xf32>
    %c0_108 = arith.constant 0 : index
    %c0_109 = arith.constant 0 : index
    %c1_110 = arith.constant 1 : index
    %c0_111 = arith.constant 0 : index
    %300 = vector.load %arg5[%c0_108, %c0_109, %c1_110, %c0_111] : memref<1x8x16x16xf32, #tpu.memory_space<vmem>>, vector<1x8x1x16xf32>
    %301 = vector.shape_cast %300 : vector<1x8x1x16xf32> to vector<8x16xf32>
    %302 = vector.shape_cast %299 : vector<8x16xf32> to vector<1x8x1x16xf32>
    tpu.vector_store %arg5[%c0_108, %c0_109, %c1_110, %c0_111], %302 {strides = array<i32>} : memref<1x8x16x16xf32, #tpu.memory_space<vmem>>, vector<1x8x1x16xf32>,
    %303 = vector.extract_strided_slice %294 {offsets = [0, 36], sizes = [8, 16], strides = [1, 1]} : vector<8x286xf32> to vector<8x16xf32>
    %c0_112 = arith.constant 0 : index
    %c0_113 = arith.constant 0 : index
    %c2_114 = arith.constant 2 : index
    %c0_115 = arith.constant 0 : index
    %304 = vector.load %arg5[%c0_112, %c0_113, %c2_114, %c0_115] : memref<1x8x16x16xf32, #tpu.memory_space<vmem>>, vector<1x8x1x16xf32>
    %305 = vector.shape_cast %304 : vector<1x8x1x16xf32> to vector<8x16xf32>
    %306 = vector.shape_cast %303 : vector<8x16xf32> to vector<1x8x1x16xf32>
    tpu.vector_store %arg5[%c0_112, %c0_113, %c2_114, %c0_115], %306 {strides = array<i32>} : memref<1x8x16x16xf32, #tpu.memory_space<vmem>>, vector<1x8x1x16xf32>,
    %307 = vector.extract_strided_slice %294 {offsets = [0, 54], sizes = [8, 16], strides = [1, 1]} : vector<8x286xf32> to vector<8x16xf32>
    %c0_116 = arith.constant 0 : index
    %c0_117 = arith.constant 0 : index
    %c3_118 = arith.constant 3 : index
    %c0_119 = arith.constant 0 : index
    %308 = vector.load %arg5[%c0_116, %c0_117, %c3_118, %c0_119] : memref<1x8x16x16xf32, #tpu.memory_space<vmem>>, vector<1x8x1x16xf32>
    %309 = vector.shape_cast %308 : vector<1x8x1x16xf32> to vector<8x16xf32>
    %310 = vector.shape_cast %307 : vector<8x16xf32> to vector<1x8x1x16xf32>
    tpu.vector_store %arg5[%c0_116, %c0_117, %c3_118, %c0_119], %310 {strides = array<i32>} : memref<1x8x16x16xf32, #tpu.memory_space<vmem>>, vector<1x8x1x16xf32>,
    %311 = vector.extract_strided_slice %294 {offsets = [0, 72], sizes = [8, 16], strides = [1, 1]} : vector<8x286xf32> to vector<8x16xf32>
    %c0_120 = arith.constant 0 : index
    %c0_121 = arith.constant 0 : index
    %c4 = arith.constant 4 : index
    %c0_122 = arith.constant 0 : index
    %312 = vector.load %arg5[%c0_120, %c0_121, %c4, %c0_122] : memref<1x8x16x16xf32, #tpu.memory_space<vmem>>, vector<1x8x1x16xf32>
    %313 = vector.shape_cast %312 : vector<1x8x1x16xf32> to vector<8x16xf32>
    %314 = vector.shape_cast %311 : vector<8x16xf32> to vector<1x8x1x16xf32>
    tpu.vector_store %arg5[%c0_120, %c0_121, %c4, %c0_122], %314 {strides = array<i32>} : memref<1x8x16x16xf32, #tpu.memory_space<vmem>>, vector<1x8x1x16xf32>,
    %315 = vector.extract_strided_slice %294 {offsets = [0, 90], sizes = [8, 16], strides = [1, 1]} : vector<8x286xf32> to vector<8x16xf32>
    %c0_123 = arith.constant 0 : index
    %c0_124 = arith.constant 0 : index
    %c5 = arith.constant 5 : index
    %c0_125 = arith.constant 0 : index
    %316 = vector.load %arg5[%c0_123, %c0_124, %c5, %c0_125] : memref<1x8x16x16xf32, #tpu.memory_space<vmem>>, vector<1x8x1x16xf32>
    %317 = vector.shape_cast %316 : vector<1x8x1x16xf32> to vector<8x16xf32>
    %318 = vector.shape_cast %315 : vector<8x16xf32> to vector<1x8x1x16xf32>
    tpu.vector_store %arg5[%c0_123, %c0_124, %c5, %c0_125], %318 {strides = array<i32>} : memref<1x8x16x16xf32, #tpu.memory_space<vmem>>, vector<1x8x1x16xf32>,
    %319 = vector.extract_strided_slice %294 {offsets = [0, 108], sizes = [8, 16], strides = [1, 1]} : vector<8x286xf32> to vector<8x16xf32>
    %c0_126 = arith.constant 0 : index
    %c0_127 = arith.constant 0 : index
    %c6 = arith.constant 6 : index
    %c0_128 = arith.constant 0 : index
    %320 = vector.load %arg5[%c0_126, %c0_127, %c6, %c0_128] : memref<1x8x16x16xf32, #tpu.memory_space<vmem>>, vector<1x8x1x16xf32>
    %321 = vector.shape_cast %320 : vector<1x8x1x16xf32> to vector<8x16xf32>
    %322 = vector.shape_cast %319 : vector<8x16xf32> to vector<1x8x1x16xf32>
    tpu.vector_store %arg5[%c0_126, %c0_127, %c6, %c0_128], %322 {strides = array<i32>} : memref<1x8x16x16xf32, #tpu.memory_space<vmem>>, vector<1x8x1x16xf32>,
    %323 = vector.extract_strided_slice %294 {offsets = [0, 126], sizes = [8, 16], strides = [1, 1]} : vector<8x286xf32> to vector<8x16xf32>
    %c0_129 = arith.constant 0 : index
    %c0_130 = arith.constant 0 : index
    %c7 = arith.constant 7 : index
    %c0_131 = arith.constant 0 : index
    %324 = vector.load %arg5[%c0_129, %c0_130, %c7, %c0_131] : memref<1x8x16x16xf32, #tpu.memory_space<vmem>>, vector<1x8x1x16xf32>
    %325 = vector.shape_cast %324 : vector<1x8x1x16xf32> to vector<8x16xf32>
    %326 = vector.shape_cast %323 : vector<8x16xf32> to vector<1x8x1x16xf32>
    tpu.vector_store %arg5[%c0_129, %c0_130, %c7, %c0_131], %326 {strides = array<i32>} : memref<1x8x16x16xf32, #tpu.memory_space<vmem>>, vector<1x8x1x16xf32>,
    %327 = vector.extract_strided_slice %294 {offsets = [0, 144], sizes = [8, 16], strides = [1, 1]} : vector<8x286xf32> to vector<8x16xf32>
    %c0_132 = arith.constant 0 : index
    %c0_133 = arith.constant 0 : index
    %c8 = arith.constant 8 : index
    %c0_134 = arith.constant 0 : index
    %328 = vector.load %arg5[%c0_132, %c0_133, %c8, %c0_134] : memref<1x8x16x16xf32, #tpu.memory_space<vmem>>, vector<1x8x1x16xf32>
    %329 = vector.shape_cast %328 : vector<1x8x1x16xf32> to vector<8x16xf32>
    %330 = vector.shape_cast %327 : vector<8x16xf32> to vector<1x8x1x16xf32>
    tpu.vector_store %arg5[%c0_132, %c0_133, %c8, %c0_134], %330 {strides = array<i32>} : memref<1x8x16x16xf32, #tpu.memory_space<vmem>>, vector<1x8x1x16xf32>,
    %331 = vector.extract_strided_slice %294 {offsets = [0, 162], sizes = [8, 16], strides = [1, 1]} : vector<8x286xf32> to vector<8x16xf32>
    %c0_135 = arith.constant 0 : index
    %c0_136 = arith.constant 0 : index
    %c9 = arith.constant 9 : index
    %c0_137 = arith.constant 0 : index
    %332 = vector.load %arg5[%c0_135, %c0_136, %c9, %c0_137] : memref<1x8x16x16xf32, #tpu.memory_space<vmem>>, vector<1x8x1x16xf32>
    %333 = vector.shape_cast %332 : vector<1x8x1x16xf32> to vector<8x16xf32>
    %334 = vector.shape_cast %331 : vector<8x16xf32> to vector<1x8x1x16xf32>
    tpu.vector_store %arg5[%c0_135, %c0_136, %c9, %c0_137], %334 {strides = array<i32>} : memref<1x8x16x16xf32, #tpu.memory_space<vmem>>, vector<1x8x1x16xf32>,
    %335 = vector.extract_strided_slice %294 {offsets = [0, 180], sizes = [8, 16], strides = [1, 1]} : vector<8x286xf32> to vector<8x16xf32>
    %c0_138 = arith.constant 0 : index
    %c0_139 = arith.constant 0 : index
    %c10 = arith.constant 10 : index
    %c0_140 = arith.constant 0 : index
    %336 = vector.load %arg5[%c0_138, %c0_139, %c10, %c0_140] : memref<1x8x16x16xf32, #tpu.memory_space<vmem>>, vector<1x8x1x16xf32>
    %337 = vector.shape_cast %336 : vector<1x8x1x16xf32> to vector<8x16xf32>
    %338 = vector.shape_cast %335 : vector<8x16xf32> to vector<1x8x1x16xf32>
    tpu.vector_store %arg5[%c0_138, %c0_139, %c10, %c0_140], %338 {strides = array<i32>} : memref<1x8x16x16xf32, #tpu.memory_space<vmem>>, vector<1x8x1x16xf32>,
    %339 = vector.extract_strided_slice %294 {offsets = [0, 198], sizes = [8, 16], strides = [1, 1]} : vector<8x286xf32> to vector<8x16xf32>
    %c0_141 = arith.constant 0 : index
    %c0_142 = arith.constant 0 : index
    %c11 = arith.constant 11 : index
    %c0_143 = arith.constant 0 : index
    %340 = vector.load %arg5[%c0_141, %c0_142, %c11, %c0_143] : memref<1x8x16x16xf32, #tpu.memory_space<vmem>>, vector<1x8x1x16xf32>
    %341 = vector.shape_cast %340 : vector<1x8x1x16xf32> to vector<8x16xf32>
    %342 = vector.shape_cast %339 : vector<8x16xf32> to vector<1x8x1x16xf32>
    tpu.vector_store %arg5[%c0_141, %c0_142, %c11, %c0_143], %342 {strides = array<i32>} : memref<1x8x16x16xf32, #tpu.memory_space<vmem>>, vector<1x8x1x16xf32>,
    %343 = vector.extract_strided_slice %294 {offsets = [0, 216], sizes = [8, 16], strides = [1, 1]} : vector<8x286xf32> to vector<8x16xf32>
    %c0_144 = arith.constant 0 : index
    %c0_145 = arith.constant 0 : index
    %c12 = arith.constant 12 : index
    %c0_146 = arith.constant 0 : index
    %344 = vector.load %arg5[%c0_144, %c0_145, %c12, %c0_146] : memref<1x8x16x16xf32, #tpu.memory_space<vmem>>, vector<1x8x1x16xf32>
    %345 = vector.shape_cast %344 : vector<1x8x1x16xf32> to vector<8x16xf32>
    %346 = vector.shape_cast %343 : vector<8x16xf32> to vector<1x8x1x16xf32>
    tpu.vector_store %arg5[%c0_144, %c0_145, %c12, %c0_146], %346 {strides = array<i32>} : memref<1x8x16x16xf32, #tpu.memory_space<vmem>>, vector<1x8x1x16xf32>,
    %347 = vector.extract_strided_slice %294 {offsets = [0, 234], sizes = [8, 16], strides = [1, 1]} : vector<8x286xf32> to vector<8x16xf32>
    %c0_147 = arith.constant 0 : index
    %c0_148 = arith.constant 0 : index
    %c13 = arith.constant 13 : index
    %c0_149 = arith.constant 0 : index
    %348 = vector.load %arg5[%c0_147, %c0_148, %c13, %c0_149] : memref<1x8x16x16xf32, #tpu.memory_space<vmem>>, vector<1x8x1x16xf32>
    %349 = vector.shape_cast %348 : vector<1x8x1x16xf32> to vector<8x16xf32>
    %350 = vector.shape_cast %347 : vector<8x16xf32> to vector<1x8x1x16xf32>
    tpu.vector_store %arg5[%c0_147, %c0_148, %c13, %c0_149], %350 {strides = array<i32>} : memref<1x8x16x16xf32, #tpu.memory_space<vmem>>, vector<1x8x1x16xf32>,
    %351 = vector.extract_strided_slice %294 {offsets = [0, 252], sizes = [8, 16], strides = [1, 1]} : vector<8x286xf32> to vector<8x16xf32>
    %c0_150 = arith.constant 0 : index
    %c0_151 = arith.constant 0 : index
    %c14 = arith.constant 14 : index
    %c0_152 = arith.constant 0 : index
    %352 = vector.load %arg5[%c0_150, %c0_151, %c14, %c0_152] : memref<1x8x16x16xf32, #tpu.memory_space<vmem>>, vector<1x8x1x16xf32>
    %353 = vector.shape_cast %352 : vector<1x8x1x16xf32> to vector<8x16xf32>
    %354 = vector.shape_cast %351 : vector<8x16xf32> to vector<1x8x1x16xf32>
    tpu.vector_store %arg5[%c0_150, %c0_151, %c14, %c0_152], %354 {strides = array<i32>} : memref<1x8x16x16xf32, #tpu.memory_space<vmem>>, vector<1x8x1x16xf32>,
    %355 = vector.extract_strided_slice %294 {offsets = [0, 270], sizes = [8, 16], strides = [1, 1]} : vector<8x286xf32> to vector<8x16xf32>
    %c0_153 = arith.constant 0 : index
    %c0_154 = arith.constant 0 : index
    %c15 = arith.constant 15 : index
    %c0_155 = arith.constant 0 : index
    %356 = vector.load %arg5[%c0_153, %c0_154, %c15, %c0_155] : memref<1x8x16x16xf32, #tpu.memory_space<vmem>>, vector<1x8x1x16xf32>
    %357 = vector.shape_cast %356 : vector<1x8x1x16xf32> to vector<8x16xf32>
    %358 = vector.shape_cast %355 : vector<8x16xf32> to vector<1x8x1x16xf32>
    tpu.vector_store %arg5[%c0_153, %c0_154, %c15, %c0_155], %358 {strides = array<i32>} : memref<1x8x16x16xf32, #tpu.memory_space<vmem>>, vector<1x8x1x16xf32>,
    return
  }
  func.func @transform_0(%arg0: i32) -> (i32, i32, i32) {
    %c0_i32 = arith.constant 0 : i32
    %c0_i32_0 = arith.constant 0 : i32
    %c0_i32_1 = arith.constant 0 : i32
    return %arg0, %c0_i32, %c0_i32_0 : i32, i32, i32
  }
  func.func @transform_1(%arg0: i32) -> (i32, i32) {
    %c0_i32 = arith.constant 0 : i32
    %c0_i32_0 = arith.constant 0 : i32
    %c0_i32_1 = arith.constant 0 : i32
    return %c0_i32, %c0_i32_0 : i32, i32
  }
  func.func @transform_2(%arg0: i32) -> (i32, i32) {
    %c0_i32 = arith.constant 0 : i32
    %c0_i32_0 = arith.constant 0 : i32
    %c0_i32_1 = arith.constant 0 : i32
    return %c0_i32, %c0_i32_0 : i32, i32
  }
  func.func @transform_3(%arg0: i32) -> (i32, i32) {
    %c0_i32 = arith.constant 0 : i32
    %c0_i32_0 = arith.constant 0 : i32
    %c0_i32_1 = arith.constant 0 : i32
    return %c0_i32, %c0_i32_0 : i32, i32
  }
  func.func @transform_4(%arg0: i32) -> (i32, i32, i32, i32) {
    %c0_i32 = arith.constant 0 : i32
    %c0_i32_0 = arith.constant 0 : i32
    %c0_i32_1 = arith.constant 0 : i32
    %c0_i32_2 = arith.constant 0 : i32
    return %arg0, %c0_i32, %c0_i32_0, %c0_i32_1 : i32, i32, i32, i32
  }
}

</mosaic_0001>

<llo_original>
// kernel: maskpro_conv2d_forward.1
$region0: #{maskpro_conv2d_forward.1}
  #allocation0 [shape = 'u32[]', space=smem, size = 0x4, offset = 0x4, fixed_abs, tag = 'smem constant byte address 0x4 - core index']
  #allocation1 [shape = 'u32[144,128]{1,0:T(1,128)}', space=vmem, size = 0x12000, scoped, tag = 'internal scratch']
  %s0 = inlined_call_operand.vmem [shape: bf16[2,4,324], index: 0, kind: input, shape index: {}]
  %s1 = inlined_call_operand.vmem [shape: f32[8,36], index: 1, kind: input, shape index: {}]
  %s2 = inlined_call_operand.vmem [shape: f32[8,36], index: 2, kind: input, shape index: {}]
  %s3 = inlined_call_operand.vmem [shape: f32[8,1], index: 3, kind: input, shape index: {}]
  %s4 = inlined_call_operand.hbm [shape: f32[2,8,16,16], index: 4, kind: output, shape index: {}]
  %s5 = sld [smem:[#allocation0]]
  $region49: #{maskpro_conv2d_forward.1} parent=0
    _
  %s7 = ssub.s32 1, %s5
  %s8 = scalar_select 0, %s7, %s5
  $region1: #{maskpro_conv2d_forward.1} parent=0
    #allocation2 [shape = 'u8[131072]{0}', space=vmem, size = 0x20000, scoped, tag = 'output window, operand 0']
    #allocation3 [shape = 's32[2]{0}', space=sflag, size = 0x8, scoped, tag = 'scoped memory for maskpro_conv2d_forward.1']
    %9 = vsyncpa [#allocation3], 0
    %s10 = scalar_lea.sflag [#allocation3], 1
    %11 = vsyncpa %s10, 0
    loop: start=0, step=1, limit=4
    $region2: #{maskpro_conv2d_forward.1} parent=1 // loop_pre_header
      _
    $region3: #{maskpro_conv2d_forward.1} parent=1 // loop_header
      %s13 = sphi 0, %s17
      %p14 = scmp.ge.s32.totalorder %s13, 4
      %s23 = sphi 0, %s25
      %s26 = sphi 0, %s23
      %s27 = sphi 0, %s26
      %s43 = sphi 0, %s27
      %s47 = sphi 0, %s47
      %s49 = sphi 0, %s47
      %s50 = sphi 0, %s49
      %s64 = sphi 0, %s50
      %s68 = sphi 0, %s68
      %s70 = sphi 0, %s68
      %s71 = sphi 0, %s70
      %s85 = sphi 0, %s71
      %s89 = sphi 0, %s89
      %s91 = sphi 0, %s89
      %s92 = sphi 0, %s91
      %s106 = sphi 0, %s92
      %s112 = sphi 0, %s114
      %s115 = sphi 0, %s112
      %s116 = sphi 0, %s115
      %s132 = sphi 0, %s116
    $region4: #{maskpro_conv2d_forward.1} parent=1 // loop_header_branch
      %16 = sbr.rel (%p14) target = $region8
    $region5: #{maskpro_conv2d_forward.1} parent=1 // loop_body
      %s18 = ssub.s32 %s13, 1
      %s19 = ssub.s32 %s13, 2
      %s20 = sadd.s32 %s13, 1
      %s21 = ssub.s32 %s13, %s20
      %p22 = scmp.eq.s32.totalorder %s21, 0
      %s24 = sadd.s32 %s23, 1
      %s25 = scalar_select %p22, %s23, %s24
      %p28 = pneg %p22
      %p29 = scmp.eq.s32.totalorder %s13, 1
      %p30 = por %p28, %p29
      %p31 = scmp.ne.s32.totalorder %s23, %s26
      %p32 = scmp.eq.s32.totalorder %s13, 0
      %p33 = por %p31, %p32
      %p34 = scmp.ne.s32.totalorder %s23, %s26
      %p35 = scmp.eq.s32.totalorder %s18, 1
      %p36 = por %p34, %p35
      %p37 = scmp.ne.s32.totalorder %s26, %s27
      %p38 = scmp.eq.s32.totalorder %s18, 0
      %p39 = por %p37, %p38
      %p40 = scmp.ne.s32.totalorder %s26, %s27
      %p41 = scmp.eq.s32.totalorder %s19, 1
      %p42 = por %p40, %p41
      %p44 = scmp.ne.s32.totalorder %s27, %s43
      %p45 = scmp.eq.s32.totalorder %s19, 0
      %p46 = por %p44, %p45
      %s48 = sadd.s32 %s47, 1
      %p51 = scmp.eq.s32.totalorder %s13, 1
      %p52 = scmp.ne.s32.totalorder %s47, %s49
      %p53 = scmp.eq.s32.totalorder %s13, 0
      %p54 = por %p52, %p53
      %p55 = scmp.ne.s32.totalorder %s47, %s49
      %p56 = scmp.eq.s32.totalorder %s18, 1
      %p57 = por %p55, %p56
      %p58 = scmp.ne.s32.totalorder %s49, %s50
      %p59 = scmp.eq.s32.totalorder %s18, 0
      %p60 = por %p58, %p59
      %p61 = scmp.ne.s32.totalorder %s49, %s50
      %p62 = scmp.eq.s32.totalorder %s19, 1
      %p63 = por %p61, %p62
      %p65 = scmp.ne.s32.totalorder %s50, %s64
      %p66 = scmp.eq.s32.totalorder %s19, 0
      %p67 = por %p65, %p66
      %s69 = sadd.s32 %s68, 1
      %p72 = scmp.eq.s32.totalorder %s13, 1
      %p73 = scmp.ne.s32.totalorder %s68, %s70
      %p74 = scmp.eq.s32.totalorder %s13, 0
      %p75 = por %p73, %p74
      %p76 = scmp.ne.s32.totalorder %s68, %s70
      %p77 = scmp.eq.s32.totalorder %s18, 1
      %p78 = por %p76, %p77
      %p79 = scmp.ne.s32.totalorder %s70, %s71
      %p80 = scmp.eq.s32.totalorder %s18, 0
      %p81 = por %p79, %p80
      %p82 = scmp.ne.s32.totalorder %s70, %s71
      %p83 = scmp.eq.s32.totalorder %s19, 1
      %p84 = por %p82, %p83
      %p86 = scmp.ne.s32.totalorder %s71, %s85
      %p87 = scmp.eq.s32.totalorder %s19, 0
      %p88 = por %p86, %p87
      %s90 = sadd.s32 %s89, 1
      %p93 = scmp.eq.s32.totalorder %s13, 1
      %p94 = scmp.ne.s32.totalorder %s89, %s91
      %p95 = scmp.eq.s32.totalorder %s13, 0
      %p96 = por %p94, %p95
      %p97 = scmp.ne.s32.totalorder %s89, %s91
      %p98 = scmp.eq.s32.totalorder %s18, 1
      %p99 = por %p97, %p98
      %p100 = scmp.ne.s32.totalorder %s91, %s92
      %p101 = scmp.eq.s32.totalorder %s18, 0
      %p102 = por %p100, %p101
      %p103 = scmp.ne.s32.totalorder %s91, %s92
      %p104 = scmp.eq.s32.totalorder %s19, 1
      %p105 = por %p103, %p104
      %p107 = scmp.ne.s32.totalorder %s92, %s106
      %p108 = scmp.eq.s32.totalorder %s19, 0
      %p109 = por %p107, %p108
      %s110 = ssub.s32 %s13, %s20
      %p111 = scmp.eq.s32.totalorder %s110, 0
      %s113 = sadd.s32 %s112, 1
      %s114 = scalar_select %p111, %s112, %s113
      %p117 = pneg %p111
      %p118 = scmp.eq.s32.totalorder %s13, 1
      %p119 = por %p117, %p118
      %p120 = scmp.ne.s32.totalorder %s112, %s115
      %p121 = scmp.eq.s32.totalorder %s13, 0
      %p122 = por %p120, %p121
      %p123 = scmp.ne.s32.totalorder %s112, %s115
      %p124 = scmp.eq.s32.totalorder %s18, 1
      %p125 = por %p123, %p124
      %p126 = scmp.ne.s32.totalorder %s115, %s116
      %p127 = scmp.eq.s32.totalorder %s18, 0
      %p128 = por %p126, %p127
      %p129 = scmp.ne.s32.totalorder %s115, %s116
      %p130 = scmp.eq.s32.totalorder %s19, 1
      %p131 = por %p129, %p130
      %p133 = scmp.ne.s32.totalorder %s116, %s132
      %p134 = scmp.eq.s32.totalorder %s19, 0
      %p135 = por %p133, %p134
      %p136 = scmp.le.s32.totalorder 1, %s13
      %p137 = scmp.lt.s32.totalorder %s13, 3
      %p138 = pnand %p136, %p137
      %p139 = pneg %p138
      // Predicated region
      $region9: #{maskpro_conv2d_forward.1} parent=5 // pred_check
        _
      $region10: #{maskpro_conv2d_forward.1} parent=5 // pred_check_branch
        %141 = sbr.rel (%p138) target = $region12
      $region11: #{maskpro_conv2d_forward.1} parent=5 // pred_region
        %s142 = ssub.s32 %s13, 1
        // Predicated region
        $region13: #{maskpro_conv2d_forward.1} parent=11 // pred_check
          %p143 = pneg %p60
        $region14: #{maskpro_conv2d_forward.1} parent=11 // pred_check_branch
          %145 = sbr.rel (%p143) target = $region16
        $region15: #{maskpro_conv2d_forward.1} parent=11 // pred_region
          _
        $region16: #{maskpro_conv2d_forward.1} parent=11 // pred_fallthru
          _
        // Predicated region
        $region17: #{maskpro_conv2d_forward.1} parent=11 // pred_check
          %p146 = pneg %p81
        $region18: #{maskpro_conv2d_forward.1} parent=11 // pred_check_branch
          %148 = sbr.rel (%p146) target = $region20
        $region19: #{maskpro_conv2d_forward.1} parent=11 // pred_region
          _
        $region20: #{maskpro_conv2d_forward.1} parent=11 // pred_fallthru
          _
        // Predicated region
        $region21: #{maskpro_conv2d_forward.1} parent=11 // pred_check
          %p149 = pneg %p102
        $region22: #{maskpro_conv2d_forward.1} parent=11 // pred_check_branch
          %151 = sbr.rel (%p149) target = $region24
        $region23: #{maskpro_conv2d_forward.1} parent=11 // pred_region
          _
        $region24: #{maskpro_conv2d_forward.1} parent=11 // pred_fallthru
          _
      $region12: #{maskpro_conv2d_forward.1} parent=5 // pred_fallthru
        _
      %p152 = scmp.lt.s32.totalorder %s13, 2
      // Predicated region
      $region25: #{maskpro_conv2d_forward.1} parent=5 // pred_check
        %p153 = pneg %p152
      $region26: #{maskpro_conv2d_forward.1} parent=5 // pred_check_branch
        %155 = sbr.rel (%p153) target = $region28
      $region27: #{maskpro_conv2d_forward.1} parent=5 // pred_region
        // Predicated region
        $region29: #{maskpro_conv2d_forward.1} parent=27 // pred_check
          %p156 = pneg %p33
        $region30: #{maskpro_conv2d_forward.1} parent=27 // pred_check_branch
          %158 = sbr.rel (%p156) target = $region32
        $region31: #{maskpro_conv2d_forward.1} parent=27 // pred_region
          %p159 = scmp.lt.s32.totalorder %s13, 1
          %s160 = scalar_select %p159, %s13, 1
          %s161 = smul.addr %s160, 3
          %s162 = smul.addr %s161, 2
          %s163 = scalar_lea.vmem %s0, %s162
        $region32: #{maskpro_conv2d_forward.1} parent=27 // pred_fallthru
          _
      $region28: #{maskpro_conv2d_forward.1} parent=5 // pred_fallthru
        _
      %p164 = scmp.le.s32.totalorder 1, %s13
      %p165 = scmp.lt.s32.totalorder %s13, 3
      %p166 = pnand %p164, %p165
      %p167 = pneg %p166
      // Predicated region
      $region33: #{maskpro_conv2d_forward.1} parent=5 // pred_check
        _
      $region34: #{maskpro_conv2d_forward.1} parent=5 // pred_check_branch
        %169 = sbr.rel (%p166) target = $region36
      $region35: #{maskpro_conv2d_forward.1} parent=5 // pred_region
        %s170 = ssub.s32 %s13, 1
        %p171 = scmp.lt.s32.totalorder %s18, 1
        %s172 = scalar_select %p171, %s18, 1
        %s173 = smul.addr %s172, 3
        %s174 = smul.addr %s173, 2
        %s175 = scalar_lea.vmem %s0, %s174
        %p176 = pneg %p39
        %p177 = pneg %p36
        %p178 = pneg %p60
        %p179 = pneg %p57
        %p180 = pneg %p81
        %p181 = pneg %p78
        %p182 = pneg %p102
        %p183 = pneg %p99
        %p184 = pneg %p128
        %p185 = pneg %p125
        %s186 = sand.u32 %s115, 1
        %s187 = scalar_lea.sflag [#allocation3], %s186
        %s188 = sand.u32 %s115, 1
        %s189 = smul.addr %s188, 128
        %s190 = scalar_lea.vmem [#allocation2], %s189
        %p191 = scmp.lt.s32.totalorder %s18, 1
        %s192 = scalar_select %p191, %s18, 1
        %s193 = smul.addr %s192, 3
        %s194 = smul.addr %s193, 2
        %s195 = scalar_lea.vmem %s0, %s194
        %v196 = vld [vmem:[%s1] sm:$0xff]
        %v197 = vld [vmem:[%s2] sm:$0xff]
        %v198 = vmul.f32 %v196, %v197
        %v199 = vld [vmem:[%s195] sm:$0x15]
        %v200 = vunpack.c.l.bf16 %v199
        %v201 = vunpack.c.h.bf16 %v199
        %203 = vset.pattern.permute.xlu0 0
        %204 = vperm.xlu0 %203, %v198
        %v205 = vpop.permute.xlu0 %204
        %v209 = vlaneseq
        %v210 = vshrl.u32 %v209, 7
        %v211 = vsub.s32 0, %v210
        %v212 = vrot.slane %v200, %v211
        %v213 = vlaneseq
        %v214 = vshrl.u32 %v213, 7
        %v215 = vsub.s32 4, %v214
        %v216 = vrot.slane %v200, %v215
        %v217 = vlaneseq
        %v218 = vshrl.u32 %v217, 7
        %v219 = vsub.s32 0, %v218
        %v220 = vrot.slane %v201, %v219
        %v224 = vlaneseq
        %v225 = vshrl.u32 %v224, 7
        %v226 = vsub.s32 0, %v225
        %v227 = vrot.slane %v212, %v226
        %v228 = vlaneseq
        %v229 = vshrl.u32 %v228, 7
        %v230 = vsub.s32 0, %v229
        %v231 = vrot.slane %v216, %v230
        %v232 = vlaneseq
        %v233 = vshrl.u32 %v232, 7
        %v234 = vsub.s32 0, %v233
        %v235 = vrot.slane %v220, %v234
        %v236 = vmul.f32 %v205, %v227
        %v237 = vmul.f32 %v205, %v231
        %v238 = vmul.f32 %v205, %v235
        %v239 = vadd.f32 %v236, 0.0
        %v240 = vadd.f32 %v237, 0.0
        %v241 = vadd.f32 %v238, 0.0
        %242 = vset.pattern.permute.xlu0 1
        %243 = vperm.xlu0 %242, %v198
        %v244 = vpop.permute.xlu0 %243
        %v246 = vlaneseq
        %v247 = vshrl.u32 %v246, 7
        %v248 = vsub.s32 1, %v247
        %v249 = vrot.slane %v200, %v248
        %v250 = vlaneseq
        %v251 = vshrl.u32 %v250, 7
        %v252 = vsub.s32 5, %v251
        %v253 = vrot.slane %v200, %v252
        %v254 = vlaneseq
        %v255 = vshrl.u32 %v254, 7
        %v256 = vsub.s32 1, %v255
        %v257 = vrot.slane %v201, %v256
        %v261 = vlaneseq
        %v262 = vshrl.u32 %v261, 7
        %v263 = vsub.s32 1, %v262
        %v264 = vrot.slane %v249, %v263
        %v265 = vlaneseq
        %v266 = vshrl.u32 %v265, 7
        %v267 = vsub.s32 1, %v266
        %v268 = vrot.slane %v253, %v267
        %v269 = vlaneseq
        %v270 = vshrl.u32 %v269, 7
        %v271 = vsub.s32 1, %v270
        %v272 = vrot.slane %v257, %v271
        %v273 = vmul.f32 %v244, %v264
        %v274 = vmul.f32 %v244, %v268
        %v275 = vmul.f32 %v244, %v272
        %v276 = vadd.f32 %v239, %v273
        %v277 = vadd.f32 %v240, %v274
        %v278 = vadd.f32 %v241, %v275
        %v279 = vld [vmem:[%s195] sm:$0x2a]
        %v280 = vunpack.c.l.bf16 %v279
        %v281 = vunpack.c.h.bf16 %v279
        %282 = vset.pattern.permute.xlu0 2
        %283 = vperm.xlu0 %282, %v198
        %v284 = vpop.permute.xlu0 %283
        %v288 = vlaneseq
        %v289 = vshrl.u32 %v288, 7
        %v290 = vsub.s32 2, %v289
        %v291 = vrot.slane %v280, %v290
        %v292 = vlaneseq
        %v293 = vshrl.u32 %v292, 7
        %v294 = vsub.s32 6, %v293
        %v295 = vrot.slane %v280, %v294
        %v296 = vlaneseq
        %v297 = vshrl.u32 %v296, 7
        %v298 = vsub.s32 2, %v297
        %v299 = vrot.slane %v281, %v298
        %v303 = vlaneseq
        %v304 = vshrl.u32 %v303, 7
        %v305 = vsub.s32 2, %v304
        %v306 = vrot.slane %v291, %v305
        %v307 = vlaneseq
        %v308 = vshrl.u32 %v307, 7
        %v309 = vsub.s32 2, %v308
        %v310 = vrot.slane %v295, %v309
        %v311 = vlaneseq
        %v312 = vshrl.u32 %v311, 7
        %v313 = vsub.s32 2, %v312
        %v314 = vrot.slane %v299, %v313
        %v315 = vmul.f32 %v284, %v306
        %v316 = vmul.f32 %v284, %v310
        %v317 = vmul.f32 %v284, %v314
        %v318 = vadd.f32 %v276, %v315
        %v319 = vadd.f32 %v277, %v316
        %v320 = vadd.f32 %v278, %v317
        %321 = vset.pattern.permute.xlu0 3
        %322 = vperm.xlu0 %321, %v198
        %v323 = vpop.permute.xlu0 %322
        %v325 = vlaneseq
        %v326 = vshrl.u32 %v325, 7
        %v327 = vsub.s32 3, %v326
        %v328 = vrot.slane %v280, %v327
        %v329 = vlaneseq
        %v330 = vshrl.u32 %v329, 7
        %v331 = vsub.s32 7, %v330
        %v332 = vrot.slane %v280, %v331
        %v333 = vlaneseq
        %v334 = vshrl.u32 %v333, 7
        %v335 = vsub.s32 3, %v334
        %v336 = vrot.slane %v281, %v335
        %v340 = vlaneseq
        %v341 = vshrl.u32 %v340, 7
        %v342 = vsub.s32 3, %v341
        %v343 = vrot.slane %v328, %v342
        %v344 = vlaneseq
        %v345 = vshrl.u32 %v344, 7
        %v346 = vsub.s32 3, %v345
        %v347 = vrot.slane %v332, %v346
        %v348 = vlaneseq
        %v349 = vshrl.u32 %v348, 7
        %v350 = vsub.s32 3, %v349
        %v351 = vrot.slane %v336, %v350
        %v352 = vmul.f32 %v323, %v343
        %v353 = vmul.f32 %v323, %v347
        %v354 = vmul.f32 %v323, %v351
        %v355 = vadd.f32 %v318, %v352
        %v356 = vadd.f32 %v319, %v353
        %v357 = vadd.f32 %v320, %v354
        %358 = vset.pattern.permute.xlu0 4
        %359 = vperm.xlu0 %358, %v198
        %v360 = vpop.permute.xlu0 %359
        %v362 = vmul.f32 %v360, %v227
        %v363 = vmul.f32 %v360, %v231
        %v364 = vmul.f32 %v360, %v235
        %368 = vrot.lane.b32.xlu0 %v362, 127
        %v369 = vpop.permute.xlu0 %368
        %370 = vrot.lane.b32.xlu0 %v363, 127
        %v371 = vpop.permute.xlu0 %370
        %372 = vrot.lane.b32.xlu0 %v364, 127
        %v373 = vpop.permute.xlu0 %372
        %vm374 = vcmask 1039360
        %v375 = vsel %vm374, %v369, %v371
        %v376 = vsel %vm374, %v371, %v373
        %v380 = vadd.f32 %v355, %v375
        %v381 = vadd.f32 %v356, %v376
        %v382 = vadd.f32 %v357, %v373
        %383 = vset.pattern.permute.xlu0 5
        %384 = vperm.xlu0 %383, %v198
        %v385 = vpop.permute.xlu0 %384
        %v387 = vmul.f32 %v385, %v264
        %v388 = vmul.f32 %v385, %v268
        %v389 = vmul.f32 %v385, %v272
        %393 = vrot.lane.b32.xlu0 %v387, 127
        %v394 = vpop.permute.xlu0 %393
        %395 = vrot.lane.b32.xlu0 %v388, 127
        %v396 = vpop.permute.xlu0 %395
        %397 = vrot.lane.b32.xlu0 %v389, 127
        %v398 = vpop.permute.xlu0 %397
        %v399 = vsel %vm374, %v394, %v396
        %v400 = vsel %vm374, %v396, %v398
        %v404 = vadd.f32 %v380, %v399
        %v405 = vadd.f32 %v381, %v400
        %v406 = vadd.f32 %v382, %v398
        %407 = vset.pattern.permute.xlu0 6
        %408 = vperm.xlu0 %407, %v198
        %v409 = vpop.permute.xlu0 %408
        %v411 = vmul.f32 %v409, %v306
        %v412 = vmul.f32 %v409, %v310
        %v413 = vmul.f32 %v409, %v314
        %417 = vrot.lane.b32.xlu0 %v411, 127
        %v418 = vpop.permute.xlu0 %417
        %419 = vrot.lane.b32.xlu0 %v412, 127
        %v420 = vpop.permute.xlu0 %419
        %421 = vrot.lane.b32.xlu0 %v413, 127
        %v422 = vpop.permute.xlu0 %421
        %v423 = vsel %vm374, %v418, %v420
        %v424 = vsel %vm374, %v420, %v422
        %v428 = vadd.f32 %v404, %v423
        %v429 = vadd.f32 %v405, %v424
        %v430 = vadd.f32 %v406, %v422
        %431 = vset.pattern.permute.xlu0 7
        %432 = vperm.xlu0 %431, %v198
        %v433 = vpop.permute.xlu0 %432
        %v435 = vmul.f32 %v433, %v343
        %v436 = vmul.f32 %v433, %v347
        %v437 = vmul.f32 %v433, %v351
        %441 = vrot.lane.b32.xlu0 %v435, 127
        %v442 = vpop.permute.xlu0 %441
        %443 = vrot.lane.b32.xlu0 %v436, 127
        %v444 = vpop.permute.xlu0 %443
        %445 = vrot.lane.b32.xlu0 %v437, 127
        %v446 = vpop.permute.xlu0 %445
        %v447 = vsel %vm374, %v442, %v444
        %v448 = vsel %vm374, %v444, %v446
        %v452 = vadd.f32 %v428, %v447
        %v453 = vadd.f32 %v429, %v448
        %v454 = vadd.f32 %v430, %v446
        %455 = vset.pattern.permute.xlu0 8
        %456 = vperm.xlu0 %455, %v198
        %v457 = vpop.permute.xlu0 %456
        %v459 = vmul.f32 %v457, %v227
        %v460 = vmul.f32 %v457, %v231
        %v461 = vmul.f32 %v457, %v235
        %465 = vrot.lane.b32.xlu0 %v459, 126
        %v466 = vpop.permute.xlu0 %465
        %467 = vrot.lane.b32.xlu0 %v460, 126
        %v468 = vpop.permute.xlu0 %467
        %469 = vrot.lane.b32.xlu0 %v461, 126
        %v470 = vpop.permute.xlu0 %469
        %vm471 = vcmask 1031168
        %v472 = vsel %vm471, %v466, %v468
        %v473 = vsel %vm471, %v468, %v470
        %v477 = vadd.f32 %v452, %v472
        %v478 = vadd.f32 %v453, %v473
        %v479 = vadd.f32 %v454, %v470
        %480 = vset.pattern.permute.xlu0 9
        %481 = vperm.xlu0 %480, %v198
        %v482 = vpop.permute.xlu0 %481
        %v484 = vmul.f32 %v482, %v264
        %v485 = vmul.f32 %v482, %v268
        %v486 = vmul.f32 %v482, %v272
        %490 = vrot.lane.b32.xlu0 %v484, 126
        %v491 = vpop.permute.xlu0 %490
        %492 = vrot.lane.b32.xlu0 %v485, 126
        %v493 = vpop.permute.xlu0 %492
        %494 = vrot.lane.b32.xlu0 %v486, 126
        %v495 = vpop.permute.xlu0 %494
        %v496 = vsel %vm471, %v491, %v493
        %v497 = vsel %vm471, %v493, %v495
        %v501 = vadd.f32 %v477, %v496
        %v502 = vadd.f32 %v478, %v497
        %v503 = vadd.f32 %v479, %v495
        %504 = vset.pattern.permute.xlu0 10
        %505 = vperm.xlu0 %504, %v198
        %v506 = vpop.permute.xlu0 %505
        %v508 = vmul.f32 %v506, %v306
        %v509 = vmul.f32 %v506, %v310
        %v510 = vmul.f32 %v506, %v314
        %514 = vrot.lane.b32.xlu0 %v508, 126
        %v515 = vpop.permute.xlu0 %514
        %516 = vrot.lane.b32.xlu0 %v509, 126
        %v517 = vpop.permute.xlu0 %516
        %518 = vrot.lane.b32.xlu0 %v510, 126
        %v519 = vpop.permute.xlu0 %518
        %v520 = vsel %vm471, %v515, %v517
        %v521 = vsel %vm471, %v517, %v519
        %v525 = vadd.f32 %v501, %v520
        %v526 = vadd.f32 %v502, %v521
        %v527 = vadd.f32 %v503, %v519
        %528 = vset.pattern.permute.xlu0 11
        %529 = vperm.xlu0 %528, %v198
        %v530 = vpop.permute.xlu0 %529
        %v532 = vmul.f32 %v530, %v343
        %v533 = vmul.f32 %v530, %v347
        %v534 = vmul.f32 %v530, %v351
        %538 = vrot.lane.b32.xlu0 %v532, 126
        %v539 = vpop.permute.xlu0 %538
        %540 = vrot.lane.b32.xlu0 %v533, 126
        %v541 = vpop.permute.xlu0 %540
        %542 = vrot.lane.b32.xlu0 %v534, 126
        %v543 = vpop.permute.xlu0 %542
        %v544 = vsel %vm471, %v539, %v541
        %v545 = vsel %vm471, %v541, %v543
        %v549 = vadd.f32 %v525, %v544
        %v550 = vadd.f32 %v526, %v545
        %v551 = vadd.f32 %v527, %v543
        %552 = vset.pattern.permute.xlu0 12
        %553 = vperm.xlu0 %552, %v198
        %v554 = vpop.permute.xlu0 %553
        %v556 = vmul.f32 %v554, %v227
        %v557 = vmul.f32 %v554, %v231
        %v558 = vmul.f32 %v554, %v235
        %562 = vrot.lane.b32.xlu0 %v556, 110
        %v563 = vpop.permute.xlu0 %562
        %564 = vrot.lane.b32.xlu0 %v557, 110
        %v565 = vpop.permute.xlu0 %564
        %566 = vrot.lane.b32.xlu0 %v558, 110
        %v567 = vpop.permute.xlu0 %566
        %vm568 = vcmask 900096
        %v569 = vsel %vm568, %v563, %v565
        %v570 = vsel %vm568, %v565, %v567
        %v574 = vadd.f32 %v549, %v569
        %v575 = vadd.f32 %v550, %v570
        %v576 = vadd.f32 %v551, %v567
        %577 = vset.pattern.permute.xlu0 13
        %578 = vperm.xlu0 %577, %v198
        %v579 = vpop.permute.xlu0 %578
        %v581 = vmul.f32 %v579, %v264
        %v582 = vmul.f32 %v579, %v268
        %v583 = vmul.f32 %v579, %v272
        %587 = vrot.lane.b32.xlu0 %v581, 110
        %v588 = vpop.permute.xlu0 %587
        %589 = vrot.lane.b32.xlu0 %v582, 110
        %v590 = vpop.permute.xlu0 %589
        %591 = vrot.lane.b32.xlu0 %v583, 110
        %v592 = vpop.permute.xlu0 %591
        %v593 = vsel %vm568, %v588, %v590
        %v594 = vsel %vm568, %v590, %v592
        %v598 = vadd.f32 %v574, %v593
        %v599 = vadd.f32 %v575, %v594
        %v600 = vadd.f32 %v576, %v592
        %601 = vset.pattern.permute.xlu0 14
        %602 = vperm.xlu0 %601, %v198
        %v603 = vpop.permute.xlu0 %602
        %v605 = vmul.f32 %v603, %v306
        %v606 = vmul.f32 %v603, %v310
        %v607 = vmul.f32 %v603, %v314
        %611 = vrot.lane.b32.xlu0 %v605, 110
        %v612 = vpop.permute.xlu0 %611
        %613 = vrot.lane.b32.xlu0 %v606, 110
        %v614 = vpop.permute.xlu0 %613
        %615 = vrot.lane.b32.xlu0 %v607, 110
        %v616 = vpop.permute.xlu0 %615
        %v617 = vsel %vm568, %v612, %v614
        %v618 = vsel %vm568, %v614, %v616
        %v622 = vadd.f32 %v598, %v617
        %v623 = vadd.f32 %v599, %v618
        %v624 = vadd.f32 %v600, %v616
        %625 = vset.pattern.permute.xlu0 15
        %626 = vperm.xlu0 %625, %v198
        %v627 = vpop.permute.xlu0 %626
        %v629 = vmul.f32 %v627, %v343
        %v630 = vmul.f32 %v627, %v347
        %v631 = vmul.f32 %v627, %v351
        %635 = vrot.lane.b32.xlu0 %v629, 110
        %v636 = vpop.permute.xlu0 %635
        %637 = vrot.lane.b32.xlu0 %v630, 110
        %v638 = vpop.permute.xlu0 %637
        %639 = vrot.lane.b32.xlu0 %v631, 110
        %v640 = vpop.permute.xlu0 %639
        %v641 = vsel %vm568, %v636, %v638
        %v642 = vsel %vm568, %v638, %v640
        %v646 = vadd.f32 %v622, %v641
        %v647 = vadd.f32 %v623, %v642
        %v648 = vadd.f32 %v624, %v640
        %649 = vset.pattern.permute.xlu0 16
        %650 = vperm.xlu0 %649, %v198
        %v651 = vpop.permute.xlu0 %650
        %v653 = vmul.f32 %v651, %v227
        %v654 = vmul.f32 %v651, %v231
        %v655 = vmul.f32 %v651, %v235
        %659 = vrot.lane.b32.xlu0 %v653, 109
        %v660 = vpop.permute.xlu0 %659
        %661 = vrot.lane.b32.xlu0 %v654, 109
        %v662 = vpop.permute.xlu0 %661
        %663 = vrot.lane.b32.xlu0 %v655, 109
        %v664 = vpop.permute.xlu0 %663
        %vm665 = vcmask 891904
        %v666 = vsel %vm665, %v660, %v662
        %v667 = vsel %vm665, %v662, %v664
        %v671 = vadd.f32 %v646, %v666
        %v672 = vadd.f32 %v647, %v667
        %v673 = vadd.f32 %v648, %v664
        %674 = vset.pattern.permute.xlu0 17
        %675 = vperm.xlu0 %674, %v198
        %v676 = vpop.permute.xlu0 %675
        %v678 = vmul.f32 %v676, %v264
        %v679 = vmul.f32 %v676, %v268
        %v680 = vmul.f32 %v676, %v272
        %684 = vrot.lane.b32.xlu0 %v678, 109
        %v685 = vpop.permute.xlu0 %684
        %686 = vrot.lane.b32.xlu0 %v679, 109
        %v687 = vpop.permute.xlu0 %686
        %688 = vrot.lane.b32.xlu0 %v680, 109
        %v689 = vpop.permute.xlu0 %688
        %v690 = vsel %vm665, %v685, %v687
        %v691 = vsel %vm665, %v687, %v689
        %v695 = vadd.f32 %v671, %v690
        %v696 = vadd.f32 %v672, %v691
        %v697 = vadd.f32 %v673, %v689
        %698 = vset.pattern.permute.xlu0 18
        %699 = vperm.xlu0 %698, %v198
        %v700 = vpop.permute.xlu0 %699
        %v702 = vmul.f32 %v700, %v306
        %v703 = vmul.f32 %v700, %v310
        %v704 = vmul.f32 %v700, %v314
        %708 = vrot.lane.b32.xlu0 %v702, 109
        %v709 = vpop.permute.xlu0 %708
        %710 = vrot.lane.b32.xlu0 %v703, 109
        %v711 = vpop.permute.xlu0 %710
        %712 = vrot.lane.b32.xlu0 %v704, 109
        %v713 = vpop.permute.xlu0 %712
        %v714 = vsel %vm665, %v709, %v711
        %v715 = vsel %vm665, %v711, %v713
        %v719 = vadd.f32 %v695, %v714
        %v720 = vadd.f32 %v696, %v715
        %v721 = vadd.f32 %v697, %v713
        %722 = vset.pattern.permute.xlu0 19
        %723 = vperm.xlu0 %722, %v198
        %v724 = vpop.permute.xlu0 %723
        %v726 = vmul.f32 %v724, %v343
        %v727 = vmul.f32 %v724, %v347
        %v728 = vmul.f32 %v724, %v351
        %732 = vrot.lane.b32.xlu0 %v726, 109
        %v733 = vpop.permute.xlu0 %732
        %734 = vrot.lane.b32.xlu0 %v727, 109
        %v735 = vpop.permute.xlu0 %734
        %736 = vrot.lane.b32.xlu0 %v728, 109
        %v737 = vpop.permute.xlu0 %736
        %v738 = vsel %vm665, %v733, %v735
        %v739 = vsel %vm665, %v735, %v737
        %v743 = vadd.f32 %v719, %v738
        %v744 = vadd.f32 %v720, %v739
        %v745 = vadd.f32 %v721, %v737
        %746 = vset.pattern.permute.xlu0 20
        %747 = vperm.xlu0 %746, %v198
        %v748 = vpop.permute.xlu0 %747
        %v750 = vmul.f32 %v748, %v227
        %v751 = vmul.f32 %v748, %v231
        %v752 = vmul.f32 %v748, %v235
        %756 = vrot.lane.b32.xlu0 %v750, 108
        %v757 = vpop.permute.xlu0 %756
        %758 = vrot.lane.b32.xlu0 %v751, 108
        %v759 = vpop.permute.xlu0 %758
        %760 = vrot.lane.b32.xlu0 %v752, 108
        %v761 = vpop.permute.xlu0 %760
        %vm762 = vcmask 883712
        %v763 = vsel %vm762, %v757, %v759
        %v764 = vsel %vm762, %v759, %v761
        %v768 = vadd.f32 %v743, %v763
        %v769 = vadd.f32 %v744, %v764
        %v770 = vadd.f32 %v745, %v761
        %771 = vset.pattern.permute.xlu0 21
        %772 = vperm.xlu0 %771, %v198
        %v773 = vpop.permute.xlu0 %772
        %v775 = vmul.f32 %v773, %v264
        %v776 = vmul.f32 %v773, %v268
        %v777 = vmul.f32 %v773, %v272
        %781 = vrot.lane.b32.xlu0 %v775, 108
        %v782 = vpop.permute.xlu0 %781
        %783 = vrot.lane.b32.xlu0 %v776, 108
        %v784 = vpop.permute.xlu0 %783
        %785 = vrot.lane.b32.xlu0 %v777, 108
        %v786 = vpop.permute.xlu0 %785
        %v787 = vsel %vm762, %v782, %v784
        %v788 = vsel %vm762, %v784, %v786
        %v792 = vadd.f32 %v768, %v787
        %v793 = vadd.f32 %v769, %v788
        %v794 = vadd.f32 %v770, %v786
        %795 = vset.pattern.permute.xlu0 22
        %796 = vperm.xlu0 %795, %v198
        %v797 = vpop.permute.xlu0 %796
        %v799 = vmul.f32 %v797, %v306
        %v800 = vmul.f32 %v797, %v310
        %v801 = vmul.f32 %v797, %v314
        %805 = vrot.lane.b32.xlu0 %v799, 108
        %v806 = vpop.permute.xlu0 %805
        %807 = vrot.lane.b32.xlu0 %v800, 108
        %v808 = vpop.permute.xlu0 %807
        %809 = vrot.lane.b32.xlu0 %v801, 108
        %v810 = vpop.permute.xlu0 %809
        %v811 = vsel %vm762, %v806, %v808
        %v812 = vsel %vm762, %v808, %v810
        %v816 = vadd.f32 %v792, %v811
        %v817 = vadd.f32 %v793, %v812
        %v818 = vadd.f32 %v794, %v810
        %819 = vset.pattern.permute.xlu0 23
        %820 = vperm.xlu0 %819, %v198
        %v821 = vpop.permute.xlu0 %820
        %v823 = vmul.f32 %v821, %v343
        %v824 = vmul.f32 %v821, %v347
        %v825 = vmul.f32 %v821, %v351
        %829 = vrot.lane.b32.xlu0 %v823, 108
        %v830 = vpop.permute.xlu0 %829
        %831 = vrot.lane.b32.xlu0 %v824, 108
        %v832 = vpop.permute.xlu0 %831
        %833 = vrot.lane.b32.xlu0 %v825, 108
        %v834 = vpop.permute.xlu0 %833
        %v835 = vsel %vm762, %v830, %v832
        %v836 = vsel %vm762, %v832, %v834
        %v840 = vadd.f32 %v816, %v835
        %v841 = vadd.f32 %v817, %v836
        %v842 = vadd.f32 %v818, %v834
        %843 = vset.pattern.permute.xlu0 24
        %844 = vperm.xlu0 %843, %v198
        %v845 = vpop.permute.xlu0 %844
        %v847 = vmul.f32 %v845, %v227
        %v848 = vmul.f32 %v845, %v231
        %v849 = vmul.f32 %v845, %v235
        %853 = vrot.lane.b32.xlu0 %v847, 92
        %v854 = vpop.permute.xlu0 %853
        %855 = vrot.lane.b32.xlu0 %v848, 92
        %v856 = vpop.permute.xlu0 %855
        %857 = vrot.lane.b32.xlu0 %v849, 92
        %v858 = vpop.permute.xlu0 %857
        %vm859 = vcmask 752640
        %v860 = vsel %vm859, %v854, %v856
        %v861 = vsel %vm859, %v856, %v858
        %v865 = vadd.f32 %v840, %v860
        %v866 = vadd.f32 %v841, %v861
        %v867 = vadd.f32 %v842, %v858
        %868 = vset.pattern.permute.xlu0 25
        %869 = vperm.xlu0 %868, %v198
        %v870 = vpop.permute.xlu0 %869
        %v872 = vmul.f32 %v870, %v264
        %v873 = vmul.f32 %v870, %v268
        %v874 = vmul.f32 %v870, %v272
        %878 = vrot.lane.b32.xlu0 %v872, 92
        %v879 = vpop.permute.xlu0 %878
        %880 = vrot.lane.b32.xlu0 %v873, 92
        %v881 = vpop.permute.xlu0 %880
        %882 = vrot.lane.b32.xlu0 %v874, 92
        %v883 = vpop.permute.xlu0 %882
        %v884 = vsel %vm859, %v879, %v881
        %v885 = vsel %vm859, %v881, %v883
        %v889 = vadd.f32 %v865, %v884
        %v890 = vadd.f32 %v866, %v885
        %v891 = vadd.f32 %v867, %v883
        %892 = vset.pattern.permute.xlu0 26
        %893 = vperm.xlu0 %892, %v198
        %v894 = vpop.permute.xlu0 %893
        %v896 = vmul.f32 %v894, %v306
        %v897 = vmul.f32 %v894, %v310
        %v898 = vmul.f32 %v894, %v314
        %902 = vrot.lane.b32.xlu0 %v896, 92
        %v903 = vpop.permute.xlu0 %902
        %904 = vrot.lane.b32.xlu0 %v897, 92
        %v905 = vpop.permute.xlu0 %904
        %906 = vrot.lane.b32.xlu0 %v898, 92
        %v907 = vpop.permute.xlu0 %906
        %v908 = vsel %vm859, %v903, %v905
        %v909 = vsel %vm859, %v905, %v907
        %v913 = vadd.f32 %v889, %v908
        %v914 = vadd.f32 %v890, %v909
        %v915 = vadd.f32 %v891, %v907
        %916 = vset.pattern.permute.xlu0 27
        %917 = vperm.xlu0 %916, %v198
        %v918 = vpop.permute.xlu0 %917
        %v920 = vmul.f32 %v918, %v343
        %v921 = vmul.f32 %v918, %v347
        %v922 = vmul.f32 %v918, %v351
        %926 = vrot.lane.b32.xlu0 %v920, 92
        %v927 = vpop.permute.xlu0 %926
        %928 = vrot.lane.b32.xlu0 %v921, 92
        %v929 = vpop.permute.xlu0 %928
        %930 = vrot.lane.b32.xlu0 %v922, 92
        %v931 = vpop.permute.xlu0 %930
        %v932 = vsel %vm859, %v927, %v929
        %v933 = vsel %vm859, %v929, %v931
        %v937 = vadd.f32 %v913, %v932
        %v938 = vadd.f32 %v914, %v933
        %v939 = vadd.f32 %v915, %v931
        %940 = vset.pattern.permute.xlu0 28
        %941 = vperm.xlu0 %940, %v198
        %v942 = vpop.permute.xlu0 %941
        %v944 = vmul.f32 %v942, %v227
        %v945 = vmul.f32 %v942, %v231
        %v946 = vmul.f32 %v942, %v235
        %950 = vrot.lane.b32.xlu0 %v944, 91
        %v951 = vpop.permute.xlu0 %950
        %952 = vrot.lane.b32.xlu0 %v945, 91
        %v953 = vpop.permute.xlu0 %952
        %954 = vrot.lane.b32.xlu0 %v946, 91
        %v955 = vpop.permute.xlu0 %954
        %vm956 = vcmask 744448
        %v957 = vsel %vm956, %v951, %v953
        %v958 = vsel %vm956, %v953, %v955
        %v962 = vadd.f32 %v937, %v957
        %v963 = vadd.f32 %v938, %v958
        %v964 = vadd.f32 %v939, %v955
        %965 = vset.pattern.permute.xlu0 29
        %966 = vperm.xlu0 %965, %v198
        %v967 = vpop.permute.xlu0 %966
        %v969 = vmul.f32 %v967, %v264
        %v970 = vmul.f32 %v967, %v268
        %v971 = vmul.f32 %v967, %v272
        %975 = vrot.lane.b32.xlu0 %v969, 91
        %v976 = vpop.permute.xlu0 %975
        %977 = vrot.lane.b32.xlu0 %v970, 91
        %v978 = vpop.permute.xlu0 %977
        %979 = vrot.lane.b32.xlu0 %v971, 91
        %v980 = vpop.permute.xlu0 %979
        %v981 = vsel %vm956, %v976, %v978
        %v982 = vsel %vm956, %v978, %v980
        %v986 = vadd.f32 %v962, %v981
        %v987 = vadd.f32 %v963, %v982
        %v988 = vadd.f32 %v964, %v980
        %989 = vset.pattern.permute.xlu0 30
        %990 = vperm.xlu0 %989, %v198
        %v991 = vpop.permute.xlu0 %990
        %v993 = vmul.f32 %v991, %v306
        %v994 = vmul.f32 %v991, %v310
        %v995 = vmul.f32 %v991, %v314
        %999 = vrot.lane.b32.xlu0 %v993, 91
        %v1000 = vpop.permute.xlu0 %999
        %1001 = vrot.lane.b32.xlu0 %v994, 91
        %v1002 = vpop.permute.xlu0 %1001
        %1003 = vrot.lane.b32.xlu0 %v995, 91
        %v1004 = vpop.permute.xlu0 %1003
        %v1005 = vsel %vm956, %v1000, %v1002
        %v1006 = vsel %vm956, %v1002, %v1004
        %v1010 = vadd.f32 %v986, %v1005
        %v1011 = vadd.f32 %v987, %v1006
        %v1012 = vadd.f32 %v988, %v1004
        %1013 = vset.pattern.permute.xlu0 31
        %1014 = vperm.xlu0 %1013, %v198
        %v1015 = vpop.permute.xlu0 %1014
        %v1017 = vmul.f32 %v1015, %v343
        %v1018 = vmul.f32 %v1015, %v347
        %v1019 = vmul.f32 %v1015, %v351
        %1023 = vrot.lane.b32.xlu0 %v1017, 91
        %v1024 = vpop.permute.xlu0 %1023
        %1025 = vrot.lane.b32.xlu0 %v1018, 91
        %v1026 = vpop.permute.xlu0 %1025
        %1027 = vrot.lane.b32.xlu0 %v1019, 91
        %v1028 = vpop.permute.xlu0 %1027
        %v1029 = vsel %vm956, %v1024, %v1026
        %v1030 = vsel %vm956, %v1026, %v1028
        %v1034 = vadd.f32 %v1010, %v1029
        %v1035 = vadd.f32 %v1011, %v1030
        %v1036 = vadd.f32 %v1012, %v1028
        %1037 = vset.pattern.permute.xlu0 32
        %1038 = vperm.xlu0 %1037, %v198
        %v1039 = vpop.permute.xlu0 %1038
        %v1041 = vmul.f32 %v1039, %v227
        %v1042 = vmul.f32 %v1039, %v231
        %v1043 = vmul.f32 %v1039, %v235
        %1047 = vrot.lane.b32.xlu0 %v1041, 90
        %v1048 = vpop.permute.xlu0 %1047
        %1049 = vrot.lane.b32.xlu0 %v1042, 90
        %v1050 = vpop.permute.xlu0 %1049
        %1051 = vrot.lane.b32.xlu0 %v1043, 90
        %v1052 = vpop.permute.xlu0 %1051
        %vm1053 = vcmask 736256
        %v1054 = vsel %vm1053, %v1048, %v1050
        %v1055 = vsel %vm1053, %v1050, %v1052
        %v1059 = vadd.f32 %v1034, %v1054
        %v1060 = vadd.f32 %v1035, %v1055
        %v1061 = vadd.f32 %v1036, %v1052
        %1062 = vset.pattern.permute.xlu0 33
        %1063 = vperm.xlu0 %1062, %v198
        %v1064 = vpop.permute.xlu0 %1063
        %v1066 = vmul.f32 %v1064, %v264
        %v1067 = vmul.f32 %v1064, %v268
        %v1068 = vmul.f32 %v1064, %v272
        %1072 = vrot.lane.b32.xlu0 %v1066, 90
        %v1073 = vpop.permute.xlu0 %1072
        %1074 = vrot.lane.b32.xlu0 %v1067, 90
        %v1075 = vpop.permute.xlu0 %1074
        %1076 = vrot.lane.b32.xlu0 %v1068, 90
        %v1077 = vpop.permute.xlu0 %1076
        %v1078 = vsel %vm1053, %v1073, %v1075
        %v1079 = vsel %vm1053, %v1075, %v1077
        %v1083 = vadd.f32 %v1059, %v1078
        %v1084 = vadd.f32 %v1060, %v1079
        %v1085 = vadd.f32 %v1061, %v1077
        %1086 = vset.pattern.permute.xlu0 34
        %1087 = vperm.xlu0 %1086, %v198
        %v1088 = vpop.permute.xlu0 %1087
        %v1090 = vmul.f32 %v1088, %v306
        %v1091 = vmul.f32 %v1088, %v310
        %v1092 = vmul.f32 %v1088, %v314
        %1096 = vrot.lane.b32.xlu0 %v1090, 90
        %v1097 = vpop.permute.xlu0 %1096
        %1098 = vrot.lane.b32.xlu0 %v1091, 90
        %v1099 = vpop.permute.xlu0 %1098
        %1100 = vrot.lane.b32.xlu0 %v1092, 90
        %v1101 = vpop.permute.xlu0 %1100
        %v1102 = vsel %vm1053, %v1097, %v1099
        %v1103 = vsel %vm1053, %v1099, %v1101
        %v1107 = vadd.f32 %v1083, %v1102
        %v1108 = vadd.f32 %v1084, %v1103
        %v1109 = vadd.f32 %v1085, %v1101
        %1110 = vset.pattern.permute.xlu0 35
        %1111 = vperm.xlu0 %1110, %v198
        %v1112 = vpop.permute.xlu0 %1111
        %v1114 = vmul.f32 %v1112, %v343
        %v1115 = vmul.f32 %v1112, %v347
        %v1116 = vmul.f32 %v1112, %v351
        %1120 = vrot.lane.b32.xlu0 %v1114, 90
        %v1121 = vpop.permute.xlu0 %1120
        %1122 = vrot.lane.b32.xlu0 %v1115, 90
        %v1123 = vpop.permute.xlu0 %1122
        %1124 = vrot.lane.b32.xlu0 %v1116, 90
        %v1125 = vpop.permute.xlu0 %1124
        %v1126 = vsel %vm1053, %v1121, %v1123
        %v1127 = vsel %vm1053, %v1123, %v1125
        %v1131 = vadd.f32 %v1107, %v1126
        %v1132 = vadd.f32 %v1108, %v1127
        %v1133 = vadd.f32 %v1109, %v1125
        %v1134 = vld [vmem:[%s3] sm:$0xff]
        %1136 = vset.pattern.permute.xlu0 0
        %1137 = vperm.xlu0 %1136, %v1134
        %v1138 = vpop.permute.xlu0 %1137
        %v1140 = vadd.f32 %v1131, %v1138
        %v1141 = vadd.f32 %v1132, %v1138
        %v1142 = vadd.f32 %v1133, %v1138
        %v1144 = vcombine.high %v1140, %v1140
        %v1146 = vunpack.c.l.s4 1966171168
        %v1147 = vunpack.c.0.s8 %v1146
        %v1148 = vlaneseq
        %v1149 = vshrl.u32 %v1148, 7
        %v1150 = vsub.s32 %v1147, %v1149
        %v1151 = vrot.slane %v1140, %v1150
        %v1153 = vunpack.c.l.s4 1966171168
        %v1154 = vunpack.c.0.s8 %v1153
        %v1155 = vlaneseq
        %v1156 = vshrl.u32 %v1155, 7
        %v1157 = vsub.s32 %v1154, %v1156
        %v1158 = vrot.slane %v1144, %v1157
        %v1159 = vcombine.high %v1151, %v1151
        %v1160 = vcombine.high %v1158, %v1158
        %v1162 = vunpack.c.l.s4 1966171168
        %v1163 = vunpack.c.0.s8 %v1162
        %v1164 = vlaneseq
        %v1165 = vshrl.u32 %v1164, 7
        %v1166 = vsub.s32 %v1163, %v1165
        %v1167 = vrot.slane %v1151, %v1166
        %v1169 = vunpack.c.l.s4 1966171168
        %v1170 = vunpack.c.0.s8 %v1169
        %v1171 = vlaneseq
        %v1172 = vshrl.u32 %v1171, 7
        %v1173 = vsub.s32 %v1170, %v1172
        %v1174 = vrot.slane %v1158, %v1173
        %v1176 = vunpack.c.l.s4 1966171168
        %v1177 = vunpack.c.0.s8 %v1176
        %v1178 = vlaneseq
        %v1179 = vshrl.u32 %v1178, 7
        %v1180 = vsub.s32 %v1177, %v1179
        %v1181 = vrot.slane %v1159, %v1180
        %v1183 = vunpack.c.l.s4 1966171168
        %v1184 = vunpack.c.0.s8 %v1183
        %v1185 = vlaneseq
        %v1186 = vshrl.u32 %v1185, 7
        %v1187 = vsub.s32 %v1184, %v1186
        %v1188 = vrot.slane %v1160, %v1187
        %v1189 = vcombine.high %v1167, %v1167
        %v1190 = vcombine.high %v1174, %v1174
        %v1191 = vcombine.high %v1181, %v1181
        %v1192 = vcombine.high %v1188, %v1188
        %vm1201 = vcmask 122880
        %1202 = vst.msk [vmem:[%s190] sm:$0x1] %vm1201, %v1167
        %1203 = vst.msk [vmem:[%s190 + $0x10] sm:$0x1] %vm1201, %v1181
        %1204 = vst.msk [vmem:[%s190 + $0x20] sm:$0x1] %vm1201, %v1189
        %1205 = vst.msk [vmem:[%s190 + $0x30] sm:$0x1] %vm1201, %v1191
        %1206 = vst.msk [vmem:[%s190 + $0x40] sm:$0x1] %vm1201, %v1174
        %1207 = vst.msk [vmem:[%s190 + $0x50] sm:$0x1] %vm1201, %v1188
        %1208 = vst.msk [vmem:[%s190 + $0x60] sm:$0x1] %vm1201, %v1190
        %1209 = vst.msk [vmem:[%s190 + $0x70] sm:$0x1] %vm1201, %v1192
        %v1210 = vlaneseq
        %v1211 = vshrl.u32 %v1210, 7
        %v1212 = vsub.s32 0, %v1211
        %v1213 = vrot.slane %v1167, %v1212
        %v1214 = vlaneseq
        %v1215 = vshrl.u32 %v1214, 7
        %v1216 = vsub.s32 0, %v1215
        %v1217 = vrot.slane %v1181, %v1216
        %v1218 = vlaneseq
        %v1219 = vshrl.u32 %v1218, 7
        %v1220 = vsub.s32 0, %v1219
        %v1221 = vrot.slane %v1189, %v1220
        %v1222 = vlaneseq
        %v1223 = vshrl.u32 %v1222, 7
        %v1224 = vsub.s32 0, %v1223
        %v1225 = vrot.slane %v1191, %v1224
        %v1226 = vlaneseq
        %v1227 = vshrl.u32 %v1226, 7
        %v1228 = vsub.s32 0, %v1227
        %v1229 = vrot.slane %v1174, %v1228
        %v1230 = vlaneseq
        %v1231 = vshrl.u32 %v1230, 7
        %v1232 = vsub.s32 0, %v1231
        %v1233 = vrot.slane %v1188, %v1232
        %v1234 = vlaneseq
        %v1235 = vshrl.u32 %v1234, 7
        %v1236 = vsub.s32 0, %v1235
        %v1237 = vrot.slane %v1190, %v1236
        %v1238 = vlaneseq
        %v1239 = vshrl.u32 %v1238, 7
        %v1240 = vsub.s32 0, %v1239
        %v1241 = vrot.slane %v1192, %v1240
        %1242 = vrot.lane.b32.xlu0 %v1213, 110
        %v1243 = vpop.permute.xlu0 %1242
        %1244 = vrot.lane.b32.xlu0 %v1217, 110
        %v1245 = vpop.permute.xlu0 %1244
        %1246 = vrot.lane.b32.xlu0 %v1221, 110
        %v1247 = vpop.permute.xlu0 %1246
        %1248 = vrot.lane.b32.xlu0 %v1225, 110
        %v1249 = vpop.permute.xlu0 %1248
        %1250 = vrot.lane.b32.xlu0 %v1229, 110
        %v1251 = vpop.permute.xlu0 %1250
        %1252 = vrot.lane.b32.xlu0 %v1233, 110
        %v1253 = vpop.permute.xlu0 %1252
        %1254 = vrot.lane.b32.xlu0 %v1237, 110
        %v1255 = vpop.permute.xlu0 %1254
        %1256 = vrot.lane.b32.xlu0 %v1241, 110
        %v1257 = vpop.permute.xlu0 %1256
        %1266 = vst.msk [vmem:[%s190 + $0x1] sm:$0x1] %vm1201, %v1243
        %1267 = vst.msk [vmem:[%s190 + $0x11] sm:$0x1] %vm1201, %v1245
        %1268 = vst.msk [vmem:[%s190 + $0x21] sm:$0x1] %vm1201, %v1247
        %1269 = vst.msk [vmem:[%s190 + $0x31] sm:$0x1] %vm1201, %v1249
        %1270 = vst.msk [vmem:[%s190 + $0x41] sm:$0x1] %vm1201, %v1251
        %1271 = vst.msk [vmem:[%s190 + $0x51] sm:$0x1] %vm1201, %v1253
        %1272 = vst.msk [vmem:[%s190 + $0x61] sm:$0x1] %vm1201, %v1255
        %1273 = vst.msk [vmem:[%s190 + $0x71] sm:$0x1] %vm1201, %v1257
        %1274 = vrot.lane.b32.xlu0 %v1213, 92
        %v1275 = vpop.permute.xlu0 %1274
        %1276 = vrot.lane.b32.xlu0 %v1217, 92
        %v1277 = vpop.permute.xlu0 %1276
        %1278 = vrot.lane.b32.xlu0 %v1221, 92
        %v1279 = vpop.permute.xlu0 %1278
        %1280 = vrot.lane.b32.xlu0 %v1225, 92
        %v1281 = vpop.permute.xlu0 %1280
        %1282 = vrot.lane.b32.xlu0 %v1229, 92
        %v1283 = vpop.permute.xlu0 %1282
        %1284 = vrot.lane.b32.xlu0 %v1233, 92
        %v1285 = vpop.permute.xlu0 %1284
        %1286 = vrot.lane.b32.xlu0 %v1237, 92
        %v1287 = vpop.permute.xlu0 %1286
        %1288 = vrot.lane.b32.xlu0 %v1241, 92
        %v1289 = vpop.permute.xlu0 %1288
        %1298 = vst.msk [vmem:[%s190 + $0x2] sm:$0x1] %vm1201, %v1275
        %1299 = vst.msk [vmem:[%s190 + $0x12] sm:$0x1] %vm1201, %v1277
        %1300 = vst.msk [vmem:[%s190 + $0x22] sm:$0x1] %vm1201, %v1279
        %1301 = vst.msk [vmem:[%s190 + $0x32] sm:$0x1] %vm1201, %v1281
        %1302 = vst.msk [vmem:[%s190 + $0x42] sm:$0x1] %vm1201, %v1283
        %1303 = vst.msk [vmem:[%s190 + $0x52] sm:$0x1] %vm1201, %v1285
        %1304 = vst.msk [vmem:[%s190 + $0x62] sm:$0x1] %vm1201, %v1287
        %1305 = vst.msk [vmem:[%s190 + $0x72] sm:$0x1] %vm1201, %v1289
        %1306 = vrot.lane.b32.xlu0 %v1213, 74
        %v1307 = vpop.permute.xlu0 %1306
        %1308 = vrot.lane.b32.xlu0 %v1217, 74
        %v1309 = vpop.permute.xlu0 %1308
        %1310 = vrot.lane.b32.xlu0 %v1221, 74
        %v1311 = vpop.permute.xlu0 %1310
        %1312 = vrot.lane.b32.xlu0 %v1225, 74
        %v1313 = vpop.permute.xlu0 %1312
        %1314 = vrot.lane.b32.xlu0 %v1229, 74
        %v1315 = vpop.permute.xlu0 %1314
        %1316 = vrot.lane.b32.xlu0 %v1233, 74
        %v1317 = vpop.permute.xlu0 %1316
        %1318 = vrot.lane.b32.xlu0 %v1237, 74
        %v1319 = vpop.permute.xlu0 %1318
        %1320 = vrot.lane.b32.xlu0 %v1241, 74
        %v1321 = vpop.permute.xlu0 %1320
        %1330 = vst.msk [vmem:[%s190 + $0x3] sm:$0x1] %vm1201, %v1307
        %1331 = vst.msk [vmem:[%s190 + $0x13] sm:$0x1] %vm1201, %v1309
        %1332 = vst.msk [vmem:[%s190 + $0x23] sm:$0x1] %vm1201, %v1311
        %1333 = vst.msk [vmem:[%s190 + $0x33] sm:$0x1] %vm1201, %v1313
        %1334 = vst.msk [vmem:[%s190 + $0x43] sm:$0x1] %vm1201, %v1315
        %1335 = vst.msk [vmem:[%s190 + $0x53] sm:$0x1] %vm1201, %v1317
        %1336 = vst.msk [vmem:[%s190 + $0x63] sm:$0x1] %vm1201, %v1319
        %1337 = vst.msk [vmem:[%s190 + $0x73] sm:$0x1] %vm1201, %v1321
        %1338 = vrot.lane.b32.xlu0 %v1213, 56
        %v1339 = vpop.permute.xlu0 %1338
        %1340 = vrot.lane.b32.xlu0 %v1217, 56
        %v1341 = vpop.permute.xlu0 %1340
        %1342 = vrot.lane.b32.xlu0 %v1221, 56
        %v1343 = vpop.permute.xlu0 %1342
        %1344 = vrot.lane.b32.xlu0 %v1225, 56
        %v1345 = vpop.permute.xlu0 %1344
        %1346 = vrot.lane.b32.xlu0 %v1229, 56
        %v1347 = vpop.permute.xlu0 %1346
        %1348 = vrot.lane.b32.xlu0 %v1233, 56
        %v1349 = vpop.permute.xlu0 %1348
        %1350 = vrot.lane.b32.xlu0 %v1237, 56
        %v1351 = vpop.permute.xlu0 %1350
        %1352 = vrot.lane.b32.xlu0 %v1241, 56
        %v1353 = vpop.permute.xlu0 %1352
        %1362 = vst.msk [vmem:[%s190 + $0x4] sm:$0x1] %vm1201, %v1339
        %1363 = vst.msk [vmem:[%s190 + $0x14] sm:$0x1] %vm1201, %v1341
        %1364 = vst.msk [vmem:[%s190 + $0x24] sm:$0x1] %vm1201, %v1343
        %1365 = vst.msk [vmem:[%s190 + $0x34] sm:$0x1] %vm1201, %v1345
        %1366 = vst.msk [vmem:[%s190 + $0x44] sm:$0x1] %vm1201, %v1347
        %1367 = vst.msk [vmem:[%s190 + $0x54] sm:$0x1] %vm1201, %v1349
        %1368 = vst.msk [vmem:[%s190 + $0x64] sm:$0x1] %vm1201, %v1351
        %1369 = vst.msk [vmem:[%s190 + $0x74] sm:$0x1] %vm1201, %v1353
        %1370 = vrot.lane.b32.xlu0 %v1213, 38
        %v1371 = vpop.permute.xlu0 %1370
        %1372 = vrot.lane.b32.xlu0 %v1217, 38
        %v1373 = vpop.permute.xlu0 %1372
        %1374 = vrot.lane.b32.xlu0 %v1221, 38
        %v1375 = vpop.permute.xlu0 %1374
        %1376 = vrot.lane.b32.xlu0 %v1225, 38
        %v1377 = vpop.permute.xlu0 %1376
        %1378 = vrot.lane.b32.xlu0 %v1229, 38
        %v1379 = vpop.permute.xlu0 %1378
        %1380 = vrot.lane.b32.xlu0 %v1233, 38
        %v1381 = vpop.permute.xlu0 %1380
        %1382 = vrot.lane.b32.xlu0 %v1237, 38
        %v1383 = vpop.permute.xlu0 %1382
        %1384 = vrot.lane.b32.xlu0 %v1241, 38
        %v1385 = vpop.permute.xlu0 %1384
        %1394 = vst.msk [vmem:[%s190 + $0x5] sm:$0x1] %vm1201, %v1371
        %1395 = vst.msk [vmem:[%s190 + $0x15] sm:$0x1] %vm1201, %v1373
        %1396 = vst.msk [vmem:[%s190 + $0x25] sm:$0x1] %vm1201, %v1375
        %1397 = vst.msk [vmem:[%s190 + $0x35] sm:$0x1] %vm1201, %v1377
        %1398 = vst.msk [vmem:[%s190 + $0x45] sm:$0x1] %vm1201, %v1379
        %1399 = vst.msk [vmem:[%s190 + $0x55] sm:$0x1] %vm1201, %v1381
        %1400 = vst.msk [vmem:[%s190 + $0x65] sm:$0x1] %vm1201, %v1383
        %1401 = vst.msk [vmem:[%s190 + $0x75] sm:$0x1] %vm1201, %v1385
        %1402 = vrot.lane.b32.xlu0 %v1213, 20
        %v1403 = vpop.permute.xlu0 %1402
        %1404 = vrot.lane.b32.xlu0 %v1217, 20
        %v1405 = vpop.permute.xlu0 %1404
        %1406 = vrot.lane.b32.xlu0 %v1221, 20
        %v1407 = vpop.permute.xlu0 %1406
        %1408 = vrot.lane.b32.xlu0 %v1225, 20
        %v1409 = vpop.permute.xlu0 %1408
        %1410 = vrot.lane.b32.xlu0 %v1229, 20
        %v1411 = vpop.permute.xlu0 %1410
        %1412 = vrot.lane.b32.xlu0 %v1233, 20
        %v1413 = vpop.permute.xlu0 %1412
        %1414 = vrot.lane.b32.xlu0 %v1237, 20
        %v1415 = vpop.permute.xlu0 %1414
        %1416 = vrot.lane.b32.xlu0 %v1241, 20
        %v1417 = vpop.permute.xlu0 %1416
        %1426 = vst.msk [vmem:[%s190 + $0x6] sm:$0x1] %vm1201, %v1403
        %1427 = vst.msk [vmem:[%s190 + $0x16] sm:$0x1] %vm1201, %v1405
        %1428 = vst.msk [vmem:[%s190 + $0x26] sm:$0x1] %vm1201, %v1407
        %1429 = vst.msk [vmem:[%s190 + $0x36] sm:$0x1] %vm1201, %v1409
        %1430 = vst.msk [vmem:[%s190 + $0x46] sm:$0x1] %vm1201, %v1411
        %1431 = vst.msk [vmem:[%s190 + $0x56] sm:$0x1] %vm1201, %v1413
        %1432 = vst.msk [vmem:[%s190 + $0x66] sm:$0x1] %vm1201, %v1415
        %1433 = vst.msk [vmem:[%s190 + $0x76] sm:$0x1] %vm1201, %v1417
        %v1435 = vcombine.low %v1140, %v1141
        %v1436 = vcombine.high %v1140, %v1141
        %v1438 = vunpack.c.l.s4 1966171168
        %v1439 = vunpack.c.0.s8 %v1438
        %v1440 = vlaneseq
        %v1441 = vshrl.u32 %v1440, 7
        %v1442 = vsub.s32 %v1439, %v1441
        %v1443 = vrot.slane %v1435, %v1442
        %v1445 = vunpack.c.l.s4 1966171168
        %v1446 = vunpack.c.0.s8 %v1445
        %v1447 = vlaneseq
        %v1448 = vshrl.u32 %v1447, 7
        %v1449 = vsub.s32 %v1446, %v1448
        %v1450 = vrot.slane %v1436, %v1449
        %v1451 = vcombine.high %v1443, %v1443
        %v1452 = vcombine.high %v1450, %v1450
        %v1454 = vunpack.c.l.s4 1966171168
        %v1455 = vunpack.c.0.s8 %v1454
        %v1456 = vlaneseq
        %v1457 = vshrl.u32 %v1456, 7
        %v1458 = vsub.s32 %v1455, %v1457
        %v1459 = vrot.slane %v1443, %v1458
        %v1461 = vunpack.c.l.s4 1966171168
        %v1462 = vunpack.c.0.s8 %v1461
        %v1463 = vlaneseq
        %v1464 = vshrl.u32 %v1463, 7
        %v1465 = vsub.s32 %v1462, %v1464
        %v1466 = vrot.slane %v1450, %v1465
        %v1468 = vunpack.c.l.s4 1966171168
        %v1469 = vunpack.c.0.s8 %v1468
        %v1470 = vlaneseq
        %v1471 = vshrl.u32 %v1470, 7
        %v1472 = vsub.s32 %v1469, %v1471
        %v1473 = vrot.slane %v1451, %v1472
        %v1475 = vunpack.c.l.s4 1966171168
        %v1476 = vunpack.c.0.s8 %v1475
        %v1477 = vlaneseq
        %v1478 = vshrl.u32 %v1477, 7
        %v1479 = vsub.s32 %v1476, %v1478
        %v1480 = vrot.slane %v1452, %v1479
        %v1481 = vcombine.high %v1459, %v1459
        %v1482 = vcombine.high %v1466, %v1466
        %v1483 = vcombine.high %v1473, %v1473
        %v1484 = vcombine.high %v1480, %v1480
        %v1485 = vlaneseq
        %v1486 = vshrl.u32 %v1485, 7
        %v1487 = vsub.s32 0, %v1486
        %v1488 = vrot.slane %v1459, %v1487
        %v1489 = vlaneseq
        %v1490 = vshrl.u32 %v1489, 7
        %v1491 = vsub.s32 1, %v1490
        %v1492 = vrot.slane %v1459, %v1491
        %v1493 = vlaneseq
        %v1494 = vshrl.u32 %v1493, 7
        %v1495 = vsub.s32 0, %v1494
        %v1496 = vrot.slane %v1473, %v1495
        %v1497 = vlaneseq
        %v1498 = vshrl.u32 %v1497, 7
        %v1499 = vsub.s32 1, %v1498
        %v1500 = vrot.slane %v1473, %v1499
        %v1501 = vlaneseq
        %v1502 = vshrl.u32 %v1501, 7
        %v1503 = vsub.s32 0, %v1502
        %v1504 = vrot.slane %v1481, %v1503
        %v1505 = vlaneseq
        %v1506 = vshrl.u32 %v1505, 7
        %v1507 = vsub.s32 1, %v1506
        %v1508 = vrot.slane %v1481, %v1507
        %v1509 = vlaneseq
        %v1510 = vshrl.u32 %v1509, 7
        %v1511 = vsub.s32 0, %v1510
        %v1512 = vrot.slane %v1483, %v1511
        %v1513 = vlaneseq
        %v1514 = vshrl.u32 %v1513, 7
        %v1515 = vsub.s32 1, %v1514
        %v1516 = vrot.slane %v1483, %v1515
        %v1517 = vlaneseq
        %v1518 = vshrl.u32 %v1517, 7
        %v1519 = vsub.s32 0, %v1518
        %v1520 = vrot.slane %v1466, %v1519
        %v1521 = vlaneseq
        %v1522 = vshrl.u32 %v1521, 7
        %v1523 = vsub.s32 1, %v1522
        %v1524 = vrot.slane %v1466, %v1523
        %v1525 = vlaneseq
        %v1526 = vshrl.u32 %v1525, 7
        %v1527 = vsub.s32 0, %v1526
        %v1528 = vrot.slane %v1480, %v1527
        %v1529 = vlaneseq
        %v1530 = vshrl.u32 %v1529, 7
        %v1531 = vsub.s32 1, %v1530
        %v1532 = vrot.slane %v1480, %v1531
        %v1533 = vlaneseq
        %v1534 = vshrl.u32 %v1533, 7
        %v1535 = vsub.s32 0, %v1534
        %v1536 = vrot.slane %v1482, %v1535
        %v1537 = vlaneseq
        %v1538 = vshrl.u32 %v1537, 7
        %v1539 = vsub.s32 1, %v1538
        %v1540 = vrot.slane %v1482, %v1539
        %v1541 = vlaneseq
        %v1542 = vshrl.u32 %v1541, 7
        %v1543 = vsub.s32 0, %v1542
        %v1544 = vrot.slane %v1484, %v1543
        %v1545 = vlaneseq
        %v1546 = vshrl.u32 %v1545, 7
        %v1547 = vsub.s32 1, %v1546
        %v1548 = vrot.slane %v1484, %v1547
        %1549 = vrot.lane.b32.xlu0 %v1488, 2
        %v1550 = vpop.permute.xlu0 %1549
        %1551 = vrot.lane.b32.xlu0 %v1492, 2
        %v1552 = vpop.permute.xlu0 %1551
        %1553 = vrot.lane.b32.xlu0 %v1496, 2
        %v1554 = vpop.permute.xlu0 %1553
        %1555 = vrot.lane.b32.xlu0 %v1500, 2
        %v1556 = vpop.permute.xlu0 %1555
        %1557 = vrot.lane.b32.xlu0 %v1504, 2
        %v1558 = vpop.permute.xlu0 %1557
        %1559 = vrot.lane.b32.xlu0 %v1508, 2
        %v1560 = vpop.permute.xlu0 %1559
        %1561 = vrot.lane.b32.xlu0 %v1512, 2
        %v1562 = vpop.permute.xlu0 %1561
        %1563 = vrot.lane.b32.xlu0 %v1516, 2
        %v1564 = vpop.permute.xlu0 %1563
        %1565 = vrot.lane.b32.xlu0 %v1520, 2
        %v1566 = vpop.permute.xlu0 %1565
        %1567 = vrot.lane.b32.xlu0 %v1524, 2
        %v1568 = vpop.permute.xlu0 %1567
        %1569 = vrot.lane.b32.xlu0 %v1528, 2
        %v1570 = vpop.permute.xlu0 %1569
        %1571 = vrot.lane.b32.xlu0 %v1532, 2
        %v1572 = vpop.permute.xlu0 %1571
        %1573 = vrot.lane.b32.xlu0 %v1536, 2
        %v1574 = vpop.permute.xlu0 %1573
        %1575 = vrot.lane.b32.xlu0 %v1540, 2
        %v1576 = vpop.permute.xlu0 %1575
        %1577 = vrot.lane.b32.xlu0 %v1544, 2
        %v1578 = vpop.permute.xlu0 %1577
        %1579 = vrot.lane.b32.xlu0 %v1548, 2
        %v1580 = vpop.permute.xlu0 %1579
        %vm1581 = vcmask 15360
        %v1582 = vsel %vm1581, %v1550, %v1552
        %v1583 = vsel %vm1581, %v1554, %v1556
        %v1584 = vsel %vm1581, %v1558, %v1560
        %v1585 = vsel %vm1581, %v1562, %v1564
        %v1586 = vsel %vm1581, %v1566, %v1568
        %v1587 = vsel %vm1581, %v1570, %v1572
        %v1588 = vsel %vm1581, %v1574, %v1576
        %v1589 = vsel %vm1581, %v1578, %v1580
        %1598 = vst.msk [vmem:[%s190 + $0x7] sm:$0x1] %vm1201, %v1582
        %1599 = vst.msk [vmem:[%s190 + $0x17] sm:$0x1] %vm1201, %v1583
        %1600 = vst.msk [vmem:[%s190 + $0x27] sm:$0x1] %vm1201, %v1584
        %1601 = vst.msk [vmem:[%s190 + $0x37] sm:$0x1] %vm1201, %v1585
        %1602 = vst.msk [vmem:[%s190 + $0x47] sm:$0x1] %vm1201, %v1586
        %1603 = vst.msk [vmem:[%s190 + $0x57] sm:$0x1] %vm1201, %v1587
        %1604 = vst.msk [vmem:[%s190 + $0x67] sm:$0x1] %vm1201, %v1588
        %1605 = vst.msk [vmem:[%s190 + $0x77] sm:$0x1] %vm1201, %v1589
        %v1606 = vcombine.high %v1141, %v1141
        %v1608 = vunpack.c.l.s4 1966171168
        %v1609 = vunpack.c.0.s8 %v1608
        %v1610 = vlaneseq
        %v1611 = vshrl.u32 %v1610, 7
        %v1612 = vsub.s32 %v1609, %v1611
        %v1613 = vrot.slane %v1141, %v1612
        %v1615 = vunpack.c.l.s4 1966171168
        %v1616 = vunpack.c.0.s8 %v1615
        %v1617 = vlaneseq
        %v1618 = vshrl.u32 %v1617, 7
        %v1619 = vsub.s32 %v1616, %v1618
        %v1620 = vrot.slane %v1606, %v1619
        %v1621 = vcombine.high %v1613, %v1613
        %v1622 = vcombine.high %v1620, %v1620
        %v1624 = vunpack.c.l.s4 1966171168
        %v1625 = vunpack.c.0.s8 %v1624
        %v1626 = vlaneseq
        %v1627 = vshrl.u32 %v1626, 7
        %v1628 = vsub.s32 %v1625, %v1627
        %v1629 = vrot.slane %v1613, %v1628
        %v1631 = vunpack.c.l.s4 1966171168
        %v1632 = vunpack.c.0.s8 %v1631
        %v1633 = vlaneseq
        %v1634 = vshrl.u32 %v1633, 7
        %v1635 = vsub.s32 %v1632, %v1634
        %v1636 = vrot.slane %v1620, %v1635
        %v1638 = vunpack.c.l.s4 1966171168
        %v1639 = vunpack.c.0.s8 %v1638
        %v1640 = vlaneseq
        %v1641 = vshrl.u32 %v1640, 7
        %v1642 = vsub.s32 %v1639, %v1641
        %v1643 = vrot.slane %v1621, %v1642
        %v1645 = vunpack.c.l.s4 1966171168
        %v1646 = vunpack.c.0.s8 %v1645
        %v1647 = vlaneseq
        %v1648 = vshrl.u32 %v1647, 7
        %v1649 = vsub.s32 %v1646, %v1648
        %v1650 = vrot.slane %v1622, %v1649
        %v1651 = vcombine.high %v1629, %v1629
        %v1652 = vcombine.high %v1636, %v1636
        %v1653 = vcombine.high %v1643, %v1643
        %v1654 = vcombine.high %v1650, %v1650
        %v1655 = vlaneseq
        %v1656 = vshrl.u32 %v1655, 7
        %v1657 = vsub.s32 0, %v1656
        %v1658 = vrot.slane %v1629, %v1657
        %v1659 = vlaneseq
        %v1660 = vshrl.u32 %v1659, 7
        %v1661 = vsub.s32 0, %v1660
        %v1662 = vrot.slane %v1643, %v1661
        %v1663 = vlaneseq
        %v1664 = vshrl.u32 %v1663, 7
        %v1665 = vsub.s32 0, %v1664
        %v1666 = vrot.slane %v1651, %v1665
        %v1667 = vlaneseq
        %v1668 = vshrl.u32 %v1667, 7
        %v1669 = vsub.s32 0, %v1668
        %v1670 = vrot.slane %v1653, %v1669
        %v1671 = vlaneseq
        %v1672 = vshrl.u32 %v1671, 7
        %v1673 = vsub.s32 0, %v1672
        %v1674 = vrot.slane %v1636, %v1673
        %v1675 = vlaneseq
        %v1676 = vshrl.u32 %v1675, 7
        %v1677 = vsub.s32 0, %v1676
        %v1678 = vrot.slane %v1650, %v1677
        %v1679 = vlaneseq
        %v1680 = vshrl.u32 %v1679, 7
        %v1681 = vsub.s32 0, %v1680
        %v1682 = vrot.slane %v1652, %v1681
        %v1683 = vlaneseq
        %v1684 = vshrl.u32 %v1683, 7
        %v1685 = vsub.s32 0, %v1684
        %v1686 = vrot.slane %v1654, %v1685
        %1687 = vrot.lane.b32.xlu0 %v1658, 112
        %v1688 = vpop.permute.xlu0 %1687
        %1689 = vrot.lane.b32.xlu0 %v1662, 112
        %v1690 = vpop.permute.xlu0 %1689
        %1691 = vrot.lane.b32.xlu0 %v1666, 112
        %v1692 = vpop.permute.xlu0 %1691
        %1693 = vrot.lane.b32.xlu0 %v1670, 112
        %v1694 = vpop.permute.xlu0 %1693
        %1695 = vrot.lane.b32.xlu0 %v1674, 112
        %v1696 = vpop.permute.xlu0 %1695
        %1697 = vrot.lane.b32.xlu0 %v1678, 112
        %v1698 = vpop.permute.xlu0 %1697
        %1699 = vrot.lane.b32.xlu0 %v1682, 112
        %v1700 = vpop.permute.xlu0 %1699
        %1701 = vrot.lane.b32.xlu0 %v1686, 112
        %v1702 = vpop.permute.xlu0 %1701
        %1711 = vst.msk [vmem:[%s190 + $0x8] sm:$0x1] %vm1201, %v1688
        %1712 = vst.msk [vmem:[%s190 + $0x18] sm:$0x1] %vm1201, %v1690
        %1713 = vst.msk [vmem:[%s190 + $0x28] sm:$0x1] %vm1201, %v1692
        %1714 = vst.msk [vmem:[%s190 + $0x38] sm:$0x1] %vm1201, %v1694
        %1715 = vst.msk [vmem:[%s190 + $0x48] sm:$0x1] %vm1201, %v1696
        %1716 = vst.msk [vmem:[%s190 + $0x58] sm:$0x1] %vm1201, %v1698
        %1717 = vst.msk [vmem:[%s190 + $0x68] sm:$0x1] %vm1201, %v1700
        %1718 = vst.msk [vmem:[%s190 + $0x78] sm:$0x1] %vm1201, %v1702
        %1719 = vrot.lane.b32.xlu0 %v1658, 94
        %v1720 = vpop.permute.xlu0 %1719
        %1721 = vrot.lane.b32.xlu0 %v1662, 94
        %v1722 = vpop.permute.xlu0 %1721
        %1723 = vrot.lane.b32.xlu0 %v1666, 94
        %v1724 = vpop.permute.xlu0 %1723
        %1725 = vrot.lane.b32.xlu0 %v1670, 94
        %v1726 = vpop.permute.xlu0 %1725
        %1727 = vrot.lane.b32.xlu0 %v1674, 94
        %v1728 = vpop.permute.xlu0 %1727
        %1729 = vrot.lane.b32.xlu0 %v1678, 94
        %v1730 = vpop.permute.xlu0 %1729
        %1731 = vrot.lane.b32.xlu0 %v1682, 94
        %v1732 = vpop.permute.xlu0 %1731
        %1733 = vrot.lane.b32.xlu0 %v1686, 94
        %v1734 = vpop.permute.xlu0 %1733
        %1743 = vst.msk [vmem:[%s190 + $0x9] sm:$0x1] %vm1201, %v1720
        %1744 = vst.msk [vmem:[%s190 + $0x19] sm:$0x1] %vm1201, %v1722
        %1745 = vst.msk [vmem:[%s190 + $0x29] sm:$0x1] %vm1201, %v1724
        %1746 = vst.msk [vmem:[%s190 + $0x39] sm:$0x1] %vm1201, %v1726
        %1747 = vst.msk [vmem:[%s190 + $0x49] sm:$0x1] %vm1201, %v1728
        %1748 = vst.msk [vmem:[%s190 + $0x59] sm:$0x1] %vm1201, %v1730
        %1749 = vst.msk [vmem:[%s190 + $0x69] sm:$0x1] %vm1201, %v1732
        %1750 = vst.msk [vmem:[%s190 + $0x79] sm:$0x1] %vm1201, %v1734
        %1751 = vrot.lane.b32.xlu0 %v1658, 76
        %v1752 = vpop.permute.xlu0 %1751
        %1753 = vrot.lane.b32.xlu0 %v1662, 76
        %v1754 = vpop.permute.xlu0 %1753
        %1755 = vrot.lane.b32.xlu0 %v1666, 76
        %v1756 = vpop.permute.xlu0 %1755
        %1757 = vrot.lane.b32.xlu0 %v1670, 76
        %v1758 = vpop.permute.xlu0 %1757
        %1759 = vrot.lane.b32.xlu0 %v1674, 76
        %v1760 = vpop.permute.xlu0 %1759
        %1761 = vrot.lane.b32.xlu0 %v1678, 76
        %v1762 = vpop.permute.xlu0 %1761
        %1763 = vrot.lane.b32.xlu0 %v1682, 76
        %v1764 = vpop.permute.xlu0 %1763
        %1765 = vrot.lane.b32.xlu0 %v1686, 76
        %v1766 = vpop.permute.xlu0 %1765
        %1775 = vst.msk [vmem:[%s190 + $0xa] sm:$0x1] %vm1201, %v1752
        %1776 = vst.msk [vmem:[%s190 + $0x1a] sm:$0x1] %vm1201, %v1754
        %1777 = vst.msk [vmem:[%s190 + $0x2a] sm:$0x1] %vm1201, %v1756
        %1778 = vst.msk [vmem:[%s190 + $0x3a] sm:$0x1] %vm1201, %v1758
        %1779 = vst.msk [vmem:[%s190 + $0x4a] sm:$0x1] %vm1201, %v1760
        %1780 = vst.msk [vmem:[%s190 + $0x5a] sm:$0x1] %vm1201, %v1762
        %1781 = vst.msk [vmem:[%s190 + $0x6a] sm:$0x1] %vm1201, %v1764
        %1782 = vst.msk [vmem:[%s190 + $0x7a] sm:$0x1] %vm1201, %v1766
        %1783 = vrot.lane.b32.xlu0 %v1658, 58
        %v1784 = vpop.permute.xlu0 %1783
        %1785 = vrot.lane.b32.xlu0 %v1662, 58
        %v1786 = vpop.permute.xlu0 %1785
        %1787 = vrot.lane.b32.xlu0 %v1666, 58
        %v1788 = vpop.permute.xlu0 %1787
        %1789 = vrot.lane.b32.xlu0 %v1670, 58
        %v1790 = vpop.permute.xlu0 %1789
        %1791 = vrot.lane.b32.xlu0 %v1674, 58
        %v1792 = vpop.permute.xlu0 %1791
        %1793 = vrot.lane.b32.xlu0 %v1678, 58
        %v1794 = vpop.permute.xlu0 %1793
        %1795 = vrot.lane.b32.xlu0 %v1682, 58
        %v1796 = vpop.permute.xlu0 %1795
        %1797 = vrot.lane.b32.xlu0 %v1686, 58
        %v1798 = vpop.permute.xlu0 %1797
        %1807 = vst.msk [vmem:[%s190 + $0xb] sm:$0x1] %vm1201, %v1784
        %1808 = vst.msk [vmem:[%s190 + $0x1b] sm:$0x1] %vm1201, %v1786
        %1809 = vst.msk [vmem:[%s190 + $0x2b] sm:$0x1] %vm1201, %v1788
        %1810 = vst.msk [vmem:[%s190 + $0x3b] sm:$0x1] %vm1201, %v1790
        %1811 = vst.msk [vmem:[%s190 + $0x4b] sm:$0x1] %vm1201, %v1792
        %1812 = vst.msk [vmem:[%s190 + $0x5b] sm:$0x1] %vm1201, %v1794
        %1813 = vst.msk [vmem:[%s190 + $0x6b] sm:$0x1] %vm1201, %v1796
        %1814 = vst.msk [vmem:[%s190 + $0x7b] sm:$0x1] %vm1201, %v1798
        %1815 = vrot.lane.b32.xlu0 %v1658, 40
        %v1816 = vpop.permute.xlu0 %1815
        %1817 = vrot.lane.b32.xlu0 %v1662, 40
        %v1818 = vpop.permute.xlu0 %1817
        %1819 = vrot.lane.b32.xlu0 %v1666, 40
        %v1820 = vpop.permute.xlu0 %1819
        %1821 = vrot.lane.b32.xlu0 %v1670, 40
        %v1822 = vpop.permute.xlu0 %1821
        %1823 = vrot.lane.b32.xlu0 %v1674, 40
        %v1824 = vpop.permute.xlu0 %1823
        %1825 = vrot.lane.b32.xlu0 %v1678, 40
        %v1826 = vpop.permute.xlu0 %1825
        %1827 = vrot.lane.b32.xlu0 %v1682, 40
        %v1828 = vpop.permute.xlu0 %1827
        %1829 = vrot.lane.b32.xlu0 %v1686, 40
        %v1830 = vpop.permute.xlu0 %1829
        %1839 = vst.msk [vmem:[%s190 + $0xc] sm:$0x1] %vm1201, %v1816
        %1840 = vst.msk [vmem:[%s190 + $0x1c] sm:$0x1] %vm1201, %v1818
        %1841 = vst.msk [vmem:[%s190 + $0x2c] sm:$0x1] %vm1201, %v1820
        %1842 = vst.msk [vmem:[%s190 + $0x3c] sm:$0x1] %vm1201, %v1822
        %1843 = vst.msk [vmem:[%s190 + $0x4c] sm:$0x1] %vm1201, %v1824
        %1844 = vst.msk [vmem:[%s190 + $0x5c] sm:$0x1] %vm1201, %v1826
        %1845 = vst.msk [vmem:[%s190 + $0x6c] sm:$0x1] %vm1201, %v1828
        %1846 = vst.msk [vmem:[%s190 + $0x7c] sm:$0x1] %vm1201, %v1830
        %1847 = vrot.lane.b32.xlu0 %v1658, 22
        %v1848 = vpop.permute.xlu0 %1847
        %1849 = vrot.lane.b32.xlu0 %v1662, 22
        %v1850 = vpop.permute.xlu0 %1849
        %1851 = vrot.lane.b32.xlu0 %v1666, 22
        %v1852 = vpop.permute.xlu0 %1851
        %1853 = vrot.lane.b32.xlu0 %v1670, 22
        %v1854 = vpop.permute.xlu0 %1853
        %1855 = vrot.lane.b32.xlu0 %v1674, 22
        %v1856 = vpop.permute.xlu0 %1855
        %1857 = vrot.lane.b32.xlu0 %v1678, 22
        %v1858 = vpop.permute.xlu0 %1857
        %1859 = vrot.lane.b32.xlu0 %v1682, 22
        %v1860 = vpop.permute.xlu0 %1859
        %1861 = vrot.lane.b32.xlu0 %v1686, 22
        %v1862 = vpop.permute.xlu0 %1861
        %1871 = vst.msk [vmem:[%s190 + $0xd] sm:$0x1] %vm1201, %v1848
        %1872 = vst.msk [vmem:[%s190 + $0x1d] sm:$0x1] %vm1201, %v1850
        %1873 = vst.msk [vmem:[%s190 + $0x2d] sm:$0x1] %vm1201, %v1852
        %1874 = vst.msk [vmem:[%s190 + $0x3d] sm:$0x1] %vm1201, %v1854
        %1875 = vst.msk [vmem:[%s190 + $0x4d] sm:$0x1] %vm1201, %v1856
        %1876 = vst.msk [vmem:[%s190 + $0x5d] sm:$0x1] %vm1201, %v1858
        %1877 = vst.msk [vmem:[%s190 + $0x6d] sm:$0x1] %vm1201, %v1860
        %1878 = vst.msk [vmem:[%s190 + $0x7d] sm:$0x1] %vm1201, %v1862
        %v1880 = vcombine.low %v1141, %v1142
        %v1881 = vcombine.high %v1141, %v1142
        %v1883 = vunpack.c.l.s4 1966171168
        %v1884 = vunpack.c.0.s8 %v1883
        %v1885 = vlaneseq
        %v1886 = vshrl.u32 %v1885, 7
        %v1887 = vsub.s32 %v1884, %v1886
        %v1888 = vrot.slane %v1880, %v1887
        %v1890 = vunpack.c.l.s4 1966171168
        %v1891 = vunpack.c.0.s8 %v1890
        %v1892 = vlaneseq
        %v1893 = vshrl.u32 %v1892, 7
        %v1894 = vsub.s32 %v1891, %v1893
        %v1895 = vrot.slane %v1881, %v1894
        %v1896 = vcombine.high %v1888, %v1888
        %v1897 = vcombine.high %v1895, %v1895
        %v1899 = vunpack.c.l.s4 1966171168
        %v1900 = vunpack.c.0.s8 %v1899
        %v1901 = vlaneseq
        %v1902 = vshrl.u32 %v1901, 7
        %v1903 = vsub.s32 %v1900, %v1902
        %v1904 = vrot.slane %v1888, %v1903
        %v1906 = vunpack.c.l.s4 1966171168
        %v1907 = vunpack.c.0.s8 %v1906
        %v1908 = vlaneseq
        %v1909 = vshrl.u32 %v1908, 7
        %v1910 = vsub.s32 %v1907, %v1909
        %v1911 = vrot.slane %v1895, %v1910
        %v1913 = vunpack.c.l.s4 1966171168
        %v1914 = vunpack.c.0.s8 %v1913
        %v1915 = vlaneseq
        %v1916 = vshrl.u32 %v1915, 7
        %v1917 = vsub.s32 %v1914, %v1916
        %v1918 = vrot.slane %v1896, %v1917
        %v1920 = vunpack.c.l.s4 1966171168
        %v1921 = vunpack.c.0.s8 %v1920
        %v1922 = vlaneseq
        %v1923 = vshrl.u32 %v1922, 7
        %v1924 = vsub.s32 %v1921, %v1923
        %v1925 = vrot.slane %v1897, %v1924
        %v1926 = vcombine.high %v1904, %v1904
        %v1927 = vcombine.high %v1911, %v1911
        %v1928 = vcombine.high %v1918, %v1918
        %v1929 = vcombine.high %v1925, %v1925
        %v1930 = vlaneseq
        %v1931 = vshrl.u32 %v1930, 7
        %v1932 = vsub.s32 0, %v1931
        %v1933 = vrot.slane %v1904, %v1932
        %v1934 = vlaneseq
        %v1935 = vshrl.u32 %v1934, 7
        %v1936 = vsub.s32 1, %v1935
        %v1937 = vrot.slane %v1904, %v1936
        %v1938 = vlaneseq
        %v1939 = vshrl.u32 %v1938, 7
        %v1940 = vsub.s32 0, %v1939
        %v1941 = vrot.slane %v1918, %v1940
        %v1942 = vlaneseq
        %v1943 = vshrl.u32 %v1942, 7
        %v1944 = vsub.s32 1, %v1943
        %v1945 = vrot.slane %v1918, %v1944
        %v1946 = vlaneseq
        %v1947 = vshrl.u32 %v1946, 7
        %v1948 = vsub.s32 0, %v1947
        %v1949 = vrot.slane %v1926, %v1948
        %v1950 = vlaneseq
        %v1951 = vshrl.u32 %v1950, 7
        %v1952 = vsub.s32 1, %v1951
        %v1953 = vrot.slane %v1926, %v1952
        %v1954 = vlaneseq
        %v1955 = vshrl.u32 %v1954, 7
        %v1956 = vsub.s32 0, %v1955
        %v1957 = vrot.slane %v1928, %v1956
        %v1958 = vlaneseq
        %v1959 = vshrl.u32 %v1958, 7
        %v1960 = vsub.s32 1, %v1959
        %v1961 = vrot.slane %v1928, %v1960
        %v1962 = vlaneseq
        %v1963 = vshrl.u32 %v1962, 7
        %v1964 = vsub.s32 0, %v1963
        %v1965 = vrot.slane %v1911, %v1964
        %v1966 = vlaneseq
        %v1967 = vshrl.u32 %v1966, 7
        %v1968 = vsub.s32 1, %v1967
        %v1969 = vrot.slane %v1911, %v1968
        %v1970 = vlaneseq
        %v1971 = vshrl.u32 %v1970, 7
        %v1972 = vsub.s32 0, %v1971
        %v1973 = vrot.slane %v1925, %v1972
        %v1974 = vlaneseq
        %v1975 = vshrl.u32 %v1974, 7
        %v1976 = vsub.s32 1, %v1975
        %v1977 = vrot.slane %v1925, %v1976
        %v1978 = vlaneseq
        %v1979 = vshrl.u32 %v1978, 7
        %v1980 = vsub.s32 0, %v1979
        %v1981 = vrot.slane %v1927, %v1980
        %v1982 = vlaneseq
        %v1983 = vshrl.u32 %v1982, 7
        %v1984 = vsub.s32 1, %v1983
        %v1985 = vrot.slane %v1927, %v1984
        %v1986 = vlaneseq
        %v1987 = vshrl.u32 %v1986, 7
        %v1988 = vsub.s32 0, %v1987
        %v1989 = vrot.slane %v1929, %v1988
        %v1990 = vlaneseq
        %v1991 = vshrl.u32 %v1990, 7
        %v1992 = vsub.s32 1, %v1991
        %v1993 = vrot.slane %v1929, %v1992
        %1994 = vrot.lane.b32.xlu0 %v1933, 4
        %v1995 = vpop.permute.xlu0 %1994
        %1996 = vrot.lane.b32.xlu0 %v1937, 4
        %v1997 = vpop.permute.xlu0 %1996
        %1998 = vrot.lane.b32.xlu0 %v1941, 4
        %v1999 = vpop.permute.xlu0 %1998
        %2000 = vrot.lane.b32.xlu0 %v1945, 4
        %v2001 = vpop.permute.xlu0 %2000
        %2002 = vrot.lane.b32.xlu0 %v1949, 4
        %v2003 = vpop.permute.xlu0 %2002
        %2004 = vrot.lane.b32.xlu0 %v1953, 4
        %v2005 = vpop.permute.xlu0 %2004
        %2006 = vrot.lane.b32.xlu0 %v1957, 4
        %v2007 = vpop.permute.xlu0 %2006
        %2008 = vrot.lane.b32.xlu0 %v1961, 4
        %v2009 = vpop.permute.xlu0 %2008
        %2010 = vrot.lane.b32.xlu0 %v1965, 4
        %v2011 = vpop.permute.xlu0 %2010
        %2012 = vrot.lane.b32.xlu0 %v1969, 4
        %v2013 = vpop.permute.xlu0 %2012
        %2014 = vrot.lane.b32.xlu0 %v1973, 4
        %v2015 = vpop.permute.xlu0 %2014
        %2016 = vrot.lane.b32.xlu0 %v1977, 4
        %v2017 = vpop.permute.xlu0 %2016
        %2018 = vrot.lane.b32.xlu0 %v1981, 4
        %v2019 = vpop.permute.xlu0 %2018
        %2020 = vrot.lane.b32.xlu0 %v1985, 4
        %v2021 = vpop.permute.xlu0 %2020
        %2022 = vrot.lane.b32.xlu0 %v1989, 4
        %v2023 = vpop.permute.xlu0 %2022
        %2024 = vrot.lane.b32.xlu0 %v1993, 4
        %v2025 = vpop.permute.xlu0 %2024
        %vm2026 = vcmask 31744
        %v2027 = vsel %vm2026, %v1995, %v1997
        %v2028 = vsel %vm2026, %v1999, %v2001
        %v2029 = vsel %vm2026, %v2003, %v2005
        %v2030 = vsel %vm2026, %v2007, %v2009
        %v2031 = vsel %vm2026, %v2011, %v2013
        %v2032 = vsel %vm2026, %v2015, %v2017
        %v2033 = vsel %vm2026, %v2019, %v2021
        %v2034 = vsel %vm2026, %v2023, %v2025
        %2043 = vst.msk [vmem:[%s190 + $0xe] sm:$0x1] %vm1201, %v2027
        %2044 = vst.msk [vmem:[%s190 + $0x1e] sm:$0x1] %vm1201, %v2028
        %2045 = vst.msk [vmem:[%s190 + $0x2e] sm:$0x1] %vm1201, %v2029
        %2046 = vst.msk [vmem:[%s190 + $0x3e] sm:$0x1] %vm1201, %v2030
        %2047 = vst.msk [vmem:[%s190 + $0x4e] sm:$0x1] %vm1201, %v2031
        %2048 = vst.msk [vmem:[%s190 + $0x5e] sm:$0x1] %vm1201, %v2032
        %2049 = vst.msk [vmem:[%s190 + $0x6e] sm:$0x1] %vm1201, %v2033
        %2050 = vst.msk [vmem:[%s190 + $0x7e] sm:$0x1] %vm1201, %v2034
        %v2051 = vcombine.high %v1142, %v1142
        %v2053 = vunpack.c.l.s4 1966171168
        %v2054 = vunpack.c.0.s8 %v2053
        %v2055 = vlaneseq
        %v2056 = vshrl.u32 %v2055, 7
        %v2057 = vsub.s32 %v2054, %v2056
        %v2058 = vrot.slane %v1142, %v2057
        %v2060 = vunpack.c.l.s4 1966171168
        %v2061 = vunpack.c.0.s8 %v2060
        %v2062 = vlaneseq
        %v2063 = vshrl.u32 %v2062, 7
        %v2064 = vsub.s32 %v2061, %v2063
        %v2065 = vrot.slane %v2051, %v2064
        %v2066 = vcombine.high %v2058, %v2058
        %v2067 = vcombine.high %v2065, %v2065
        %v2069 = vunpack.c.l.s4 1966171168
        %v2070 = vunpack.c.0.s8 %v2069
        %v2071 = vlaneseq
        %v2072 = vshrl.u32 %v2071, 7
        %v2073 = vsub.s32 %v2070, %v2072
        %v2074 = vrot.slane %v2058, %v2073
        %v2076 = vunpack.c.l.s4 1966171168
        %v2077 = vunpack.c.0.s8 %v2076
        %v2078 = vlaneseq
        %v2079 = vshrl.u32 %v2078, 7
        %v2080 = vsub.s32 %v2077, %v2079
        %v2081 = vrot.slane %v2065, %v2080
        %v2083 = vunpack.c.l.s4 1966171168
        %v2084 = vunpack.c.0.s8 %v2083
        %v2085 = vlaneseq
        %v2086 = vshrl.u32 %v2085, 7
        %v2087 = vsub.s32 %v2084, %v2086
        %v2088 = vrot.slane %v2066, %v2087
        %v2090 = vunpack.c.l.s4 1966171168
        %v2091 = vunpack.c.0.s8 %v2090
        %v2092 = vlaneseq
        %v2093 = vshrl.u32 %v2092, 7
        %v2094 = vsub.s32 %v2091, %v2093
        %v2095 = vrot.slane %v2067, %v2094
        %v2096 = vcombine.high %v2074, %v2074
        %v2097 = vcombine.high %v2081, %v2081
        %v2098 = vcombine.high %v2088, %v2088
        %v2099 = vcombine.high %v2095, %v2095
        %v2100 = vlaneseq
        %v2101 = vshrl.u32 %v2100, 7
        %v2102 = vsub.s32 0, %v2101
        %v2103 = vrot.slane %v2074, %v2102
        %v2104 = vlaneseq
        %v2105 = vshrl.u32 %v2104, 7
        %v2106 = vsub.s32 0, %v2105
        %v2107 = vrot.slane %v2088, %v2106
        %v2108 = vlaneseq
        %v2109 = vshrl.u32 %v2108, 7
        %v2110 = vsub.s32 0, %v2109
        %v2111 = vrot.slane %v2096, %v2110
        %v2112 = vlaneseq
        %v2113 = vshrl.u32 %v2112, 7
        %v2114 = vsub.s32 0, %v2113
        %v2115 = vrot.slane %v2098, %v2114
        %v2116 = vlaneseq
        %v2117 = vshrl.u32 %v2116, 7
        %v2118 = vsub.s32 0, %v2117
        %v2119 = vrot.slane %v2081, %v2118
        %v2120 = vlaneseq
        %v2121 = vshrl.u32 %v2120, 7
        %v2122 = vsub.s32 0, %v2121
        %v2123 = vrot.slane %v2095, %v2122
        %v2124 = vlaneseq
        %v2125 = vshrl.u32 %v2124, 7
        %v2126 = vsub.s32 0, %v2125
        %v2127 = vrot.slane %v2097, %v2126
        %v2128 = vlaneseq
        %v2129 = vshrl.u32 %v2128, 7
        %v2130 = vsub.s32 0, %v2129
        %v2131 = vrot.slane %v2099, %v2130
        %2132 = vrot.lane.b32.xlu0 %v2103, 114
        %v2133 = vpop.permute.xlu0 %2132
        %2134 = vrot.lane.b32.xlu0 %v2107, 114
        %v2135 = vpop.permute.xlu0 %2134
        %2136 = vrot.lane.b32.xlu0 %v2111, 114
        %v2137 = vpop.permute.xlu0 %2136
        %2138 = vrot.lane.b32.xlu0 %v2115, 114
        %v2139 = vpop.permute.xlu0 %2138
        %2140 = vrot.lane.b32.xlu0 %v2119, 114
        %v2141 = vpop.permute.xlu0 %2140
        %2142 = vrot.lane.b32.xlu0 %v2123, 114
        %v2143 = vpop.permute.xlu0 %2142
        %2144 = vrot.lane.b32.xlu0 %v2127, 114
        %v2145 = vpop.permute.xlu0 %2144
        %2146 = vrot.lane.b32.xlu0 %v2131, 114
        %v2147 = vpop.permute.xlu0 %2146
        %2156 = vst.msk [vmem:[%s190 + $0xf] sm:$0x1] %vm1201, %v2133
        %2157 = vst.msk [vmem:[%s190 + $0x1f] sm:$0x1] %vm1201, %v2135
        %2158 = vst.msk [vmem:[%s190 + $0x2f] sm:$0x1] %vm1201, %v2137
        %2159 = vst.msk [vmem:[%s190 + $0x3f] sm:$0x1] %vm1201, %v2139
        %2160 = vst.msk [vmem:[%s190 + $0x4f] sm:$0x1] %vm1201, %v2141
        %2161 = vst.msk [vmem:[%s190 + $0x5f] sm:$0x1] %vm1201, %v2143
        %2162 = vst.msk [vmem:[%s190 + $0x6f] sm:$0x1] %vm1201, %v2145
        %2163 = vst.msk [vmem:[%s190 + $0x7f] sm:$0x1] %vm1201, %v2147
        %s2164 = sand.u32 %s115, 1
        %s2165 = scalar_lea.sflag [#allocation3], %s2164
        %s2166 = sand.u32 %s115, 1
        %s2167 = smul.addr %s2166, 128
        %s2168 = scalar_lea.vmem [#allocation2], %s2167
        // Predicated region
        $region37: #{maskpro_conv2d_forward.1} parent=35 // pred_check
          %p2169 = pneg %p125
        $region38: #{maskpro_conv2d_forward.1} parent=35 // pred_check_branch
          %2171 = sbr.rel (%p2169) target = $region40
        $region39: #{maskpro_conv2d_forward.1} parent=35 // pred_region
          %s2173 = ssub.s32 2048, 2048
          %2174 = vsyncadd %s2165, %s2173
          %s2175 = smul.addr %s18, 16
          %s2176 = smul.addr %s2175, 128
          %s2177 = scalar_lea.hbm %s4, %s2176
          %s2178 = sshll.u32 %s2168, 4
          %s2179 = int_to_ptr.vmem [resolvable:$true] %s2178
          %2184 = dma.vmem_to_hbm [thread:$0]  %s2179, 2048, %s2177, %s2165, 128, 128, 8
        $region40: #{maskpro_conv2d_forward.1} parent=35 // pred_fallthru
          _
      $region36: #{maskpro_conv2d_forward.1} parent=5 // pred_fallthru
        _
      %p2185 = scmp.le.s32.totalorder 2, %s13
      // Predicated region
      $region41: #{maskpro_conv2d_forward.1} parent=5 // pred_check
        %p2186 = pneg %p2185
      $region42: #{maskpro_conv2d_forward.1} parent=5 // pred_check_branch
        %2188 = sbr.rel (%p2186) target = $region44
      $region43: #{maskpro_conv2d_forward.1} parent=5 // pred_region
        %s2189 = ssub.s32 %s13, 2
        // Predicated region
        $region45: #{maskpro_conv2d_forward.1} parent=43 // pred_check
          %p2190 = pneg %p131
        $region46: #{maskpro_conv2d_forward.1} parent=43 // pred_check_branch
          %2192 = sbr.rel (%p2190) target = $region48
        $region47: #{maskpro_conv2d_forward.1} parent=43 // pred_region
          %s2193 = sand.u32 %s116, 1
          %s2194 = scalar_lea.sflag [#allocation3], %s2193
          %s2195 = sand.u32 %s116, 1
          %s2196 = smul.addr %s2195, 128
          %s2197 = scalar_lea.vmem [#allocation2], %s2196
          %2198 = dma.done %s2194, 2048
        $region48: #{maskpro_conv2d_forward.1} parent=43 // pred_fallthru
          _
      $region44: #{maskpro_conv2d_forward.1} parent=5 // pred_fallthru
        _
    $region6: #{maskpro_conv2d_forward.1} parent=1 // loop_footer
      %s17 = sadd.s32 1, %s13
    $region7: #{maskpro_conv2d_forward.1} parent=1 // loop_footer_branch
      %12 = sbr.rel target = $region3
    $region8: #{maskpro_conv2d_forward.1} parent=1 // loop_exit
      _
    %2199 = vsyncpa [#allocation3], 1
    %s2200 = scalar_lea.sflag [#allocation3], 1
    %2201 = vsyncpa %s2200, 1

</llo_original>
